<compile_context>
chip_gen: v6e
topology: v6e:2x2x1
jax: 0.10.0
libtpu: 0.0.40
codegen_flags: <defaults>
</compile_context>

<pallas_src>
import functools

import jax
import jax.numpy as jnp
import numpy as np
from jax.experimental import pallas as pl
from jax.experimental.pallas import tpu as pltpu

EPS = 1e-5


def _sigmoid(x):
    # exp -> EUP, approximate reciprocal -> EUP; off the VALU critical path.
    return pl.reciprocal(1.0 + jnp.exp(-x), approx=True)


def _scse_chw(x, waT, ba, wb, bb, ws, bs):
    """SCSEModule in channels-on-sublanes layout:  x * (cSE(x) + sSE(x)).

    x: (C, P) f32, P = H*W on lanes.
    waT:(C,Cr) ba:(1,Cr) wb:(C,Cr) bb:(C,1) ws:(C,1) bs:(1,1)
    """
    pool = jnp.mean(x, axis=1, keepdims=True)                               # (C,1) lane reduce
    hid = jnp.maximum(jnp.sum(waT * pool, axis=0, keepdims=True) + ba, 0.0)  # (1,Cr)
    cgate = _sigmoid(jnp.sum(wb * hid, axis=1, keepdims=True) + bb)          # (C,1)
    sgate = _sigmoid(jnp.sum(x * ws, axis=0, keepdims=True) + bs)            # (1,P)
    return x * (cgate + sgate)


def _conv3x3(xp_ref, a_bf16, wrow_ref, *, H, W):
    """3x3 conv (pad=1, stride=1, no bias) in CHW layout via 3 MXU matmuls (K=3*Cin).

    xp_ref : bf16 VMEM scratch (Cin, (H+2)*W + 2)  -- flat, H-padded, +1 lane each end
    a_bf16 : (Cin, H*W) bf16 conv input
    wrow_ref: (3, Cout, 3*Cin) bf16, wrow[dy][:, dx*Cin + ci] = w[co, ci, dy, dx]
    returns  (Cout, H*W) f32 accumulator
    """
    Cin, P = a_bf16.shape
    Cout = wrow_ref.shape[1]
    base = W + 1

    # Zero only the halo (head/tail); interior overwritten immediately.
    halo = jnp.zeros((Cin, base), jnp.bfloat16)
    xp_ref[:, 0:base] = halo
    xp_ref[:, base + P:base + P + base] = halo
    xp_ref[:, base:base + P] = a_bf16

    # Left/right image-border masks (the flat layout makes +-1 column shifts wrap
    # into the neighboring row; those lanes must read as zero padding).
    col = jax.lax.broadcasted_iota(jnp.int32, (1, P), 1) % W
    mask_l = col != 0          # tap dx=0 reads column w-1: invalid at w==0
    mask_r = col != (W - 1)    # tap dx=2 reads column w+1: invalid at w==W-1

    acc = jnp.zeros((Cout, P), jnp.float32)
    for dy in range(3):
        wins = []
        for dx in range(3):
            s = dy * W + dx                                   # static lane offset
            win = xp_ref[:, s:s + P]                          # (Cin, P) bf16 lane slice
            if dx == 0:
                win = jnp.where(mask_l, win, jnp.zeros_like(win))
            elif dx == 2:
                win = jnp.where(mask_r, win, jnp.zeros_like(win))
            wins.append(win)
        patch = jnp.concatenate(wins, axis=0)                 # (3*Cin, P), sublane concat
        acc = acc + jnp.dot(wrow_ref[dy], patch, preferred_element_type=jnp.float32)
    return acc


# ---------------- kernels (grid over batch, one image per step) ----------------

def _attn_conv1_kernel(x_ref, waT_ref, ba_ref, wb_ref, bb_ref, ws_ref, bs_ref,
                       wrow_ref, y_ref, st_ref, xp_ref, *, H, W):
    x = x_ref[0]                                                         # (Cin, P) f32
    a = _scse_chw(x, waT_ref[...], ba_ref[...], wb_ref[...], bb_ref[...],
                  ws_ref[...], bs_ref[...])
    acc = _conv3x3(xp_ref, a.astype(jnp.bfloat16), wrow_ref, H=H, W=W)   # (Cmid, P) f32
    # Per-tile BN partial statistics (one traversal of acc, lane reduces).
    st_ref[0, :, 0:1] = jnp.sum(acc, axis=1, keepdims=True)
    st_ref[0, :, 1:2] = jnp.sum(acc * acc, axis=1, keepdims=True)
    y_ref[0] = acc


def _bn_conv2_kernel(y_ref, sc_ref, sh_ref, wrow_ref, y2_ref, st_ref, xp_ref, *, H, W):
    # BN1 apply (precomputed per-channel scale/shift) + ReLU, lane-dense elementwise.
    z = jnp.maximum(y_ref[0] * sc_ref[...] + sh_ref[...], 0.0)           # (Cmid, P) f32
    acc = _conv3x3(xp_ref, z.astype(jnp.bfloat16), wrow_ref, H=H, W=W)   # (Cout, P) f32
    st_ref[0, :, 0:1] = jnp.sum(acc, axis=1, keepdims=True)
    st_ref[0, :, 1:2] = jnp.sum(acc * acc, axis=1, keepdims=True)
    y2_ref[0] = acc


def _bn_attn2_kernel(y_ref, sc_ref, sh_ref, waT_ref, ba_ref, wb_ref, bb_ref,
                     ws_ref, bs_ref, o_ref):
    z = jnp.maximum(y_ref[0] * sc_ref[...] + sh_ref[...], 0.0)           # (Cout, P) f32
    o_ref[0] = _scse_chw(z, waT_ref[...], ba_ref[...], wb_ref[...], bb_ref[...],
                         ws_ref[...], bs_ref[...])


# ---------------- wrapper ----------------

def _full_spec(shape):
    nd = len(shape)
    return pl.BlockSpec(shape, lambda n: (0,) * nd)


def _batch_spec(shape):
    nd = len(shape)
    return pl.BlockSpec((1,) + tuple(shape), lambda n: (n,) + (0,) * nd)


def _bn_finalize(st, gamma, beta, count):
    """Reduce per-tile partials and produce per-channel (scale, shift) columns."""
    s = jnp.sum(st[:, :, 0], axis=0)
    sq = jnp.sum(st[:, :, 1], axis=0)
    mean = s / count
    var = jnp.maximum(sq / count - mean * mean, 0.0)   # biased var (PyTorch train-mode norm)
    scale = gamma.reshape(-1) * jax.lax.rsqrt(var + EPS)
    shift = beta.reshape(-1) - mean * scale
    return scale.reshape(-1, 1), shift.reshape(-1, 1)


def conv_block(x_nchw, p):
    N, Cin, H, W = x_nchw.shape
    P = H * W
    Cmid = p['cw1'].shape[0]
    Cout = p['cw2'].shape[0]
    padlen = P + 2 * (W + 1)

    # NCHW flattened to (N, C, H*W) is a free view and already lane-dense.
    x = x_nchw.reshape(N, Cin, P).astype(jnp.float32)

    def conv_rows(cw):  # OIHW (Co,Ci,3,3) -> (3, Co, 3*Ci) bf16, dx-major columns
        return jnp.stack(
            [jnp.concatenate([cw[:, :, dy, dx] for dx in range(3)], axis=1)
             for dy in range(3)], axis=0).astype(jnp.bfloat16)

    wrow1 = conv_rows(p['cw1'])
    wrow2 = conv_rows(p['cw2'])

    def scse_args(prefix, C):
        cr = p[prefix + 'wa'].shape[0]
        return (p[prefix + 'wa'].T.reshape(C, cr),
                p[prefix + 'ba'].reshape(1, cr),
                p[prefix + 'wb'].reshape(C, cr),
                p[prefix + 'bb'].reshape(C, 1),
                p[prefix + 'ws'].reshape(C, 1),
                p[prefix + 'bs'].reshape(1, 1))

    scse1 = scse_args('a1_', Cin)
    scse2 = scse_args('a2_', Cout)

    cparams = pltpu.CompilerParams(
        dimension_semantics=("parallel",),          # batch grid -> megacore on v7x
        vmem_limit_bytes=32 * 1024 * 1024)          # per-step usage << this on all gens

    # ---- pass 1: attention1 + conv1, per-tile BN1 partial sums ----
    y1, st1 = pl.pallas_call(
        functools.partial(_attn_conv1_kernel, H=H, W=W),
        out_shape=(jax.ShapeDtypeStruct((N, Cmid, P), jnp.float32),
                   jax.ShapeDtypeStruct((N, Cmid, 2), jnp.float32)),
        grid_spec=pltpu.PrefetchScalarGridSpec(
            num_scalar_prefetch=0, grid=(N,),
            in_specs=[_batch_spec((Cin, P))]
                     + [_full_spec(a.shape) for a in scse1]
                     + [_full_spec(wrow1.shape)],
            out_specs=(_batch_spec((Cmid, P)), _batch_spec((Cmid, 2))),
            scratch_shapes=[pltpu.VMEM((Cin, padlen), jnp.bfloat16)]),
        compiler_params=cparams,
    )(x, *scse1, wrow1)
    scale1, shift1 = _bn_finalize(st1, p['g1'], p['be1'], N * P)

    # ---- pass 2: BN1 apply + ReLU + conv2, per-tile BN2 partial sums ----
    y2, st2 = pl.pallas_call(
        functools.partial(_bn_conv2_kernel, H=H, W=W),
        out_shape=(jax.ShapeDtypeStruct((N, Cout, P), jnp.float32),
                   jax.ShapeDtypeStruct((N, Cout, 2), jnp.float32)),
        grid_spec=pltpu.PrefetchScalarGridSpec(
            num_scalar_prefetch=0, grid=(N,),
            in_specs=[_batch_spec((Cmid, P)), _full_spec((Cmid, 1)),
                      _full_spec((Cmid, 1)), _full_spec(wrow2.shape)],
            out_specs=(_batch_spec((Cout, P)), _batch_spec((Cout, 2))),
            scratch_shapes=[pltpu.VMEM((Cmid, padlen), jnp.bfloat16)]),
        compiler_params=cparams,
    )(y1, scale1, shift1, wrow2)
    scale2, shift2 = _bn_finalize(st2, p['g2'], p['be2'], N * P)

    # ---- pass 3: BN2 apply + ReLU + attention2, lane-dense NCHW output ----
    out = pl.pallas_call(
        _bn_attn2_kernel,
        out_shape=jax.ShapeDtypeStruct((N, Cout, P), jnp.float32),
        grid_spec=pltpu.PrefetchScalarGridSpec(
            num_scalar_prefetch=0, grid=(N,),
            in_specs=[_batch_spec((Cout, P)), _full_spec((Cout, 1)),
                      _full_spec((Cout, 1))]
                     + [_full_spec(a.shape) for a in scse2],
            out_specs=_batch_spec((Cout, P))),
        compiler_params=cparams,
    )(y2, scale2, shift2, *scse2)

    return out.reshape(N, Cout, H, W)       # free view back to NCHW


# ---------------- synthetic parameters & pure-JAX reference ----------------

def init_params(key, cin, cmid, cout, reduction=16):
    # PyTorch-native parameter shapes (1x1 conv spatial dims squeezed).
    cr1 = cin // reduction    # module requires cin >= reduction
    cr2 = cout // reduction
    ks = jax.random.split(key, 18)
    n = jax.random.normal
    return dict(
        # attention1: SCSE(in_channels=cin)
        a1_wa=0.3 * n(ks[0], (cr1, cin), jnp.float32),
        a1_ba=0.1 * n(ks[1], (cr1,), jnp.float32),
        a1_wb=0.3 * n(ks[2], (cin, cr1), jnp.float32),
        a1_bb=0.1 * n(ks[3], (cin,), jnp.float32),
        a1_ws=0.3 * n(ks[4], (cin,), jnp.float32),
        a1_bs=0.1 * n(ks[5], (), jnp.float32),
        # conv1: Conv2d(cin, cmid, 3, padding=1, bias=False) + BN(cmid)   (OIHW)
        cw1=0.1 * n(ks[6], (cmid, cin, 3, 3), jnp.float32),
        g1=1.0 + 0.1 * n(ks[7], (cmid,), jnp.float32),
        be1=0.1 * n(ks[8], (cmid,), jnp.float32),
        # conv2: Conv2d(cmid, cout, 3, padding=1, bias=False) + BN(cout)
        cw2=0.1 * n(ks[9], (cout, cmid, 3, 3), jnp.float32),
        g2=1.0 + 0.1 * n(ks[10], (cout,), jnp.float32),
        be2=0.1 * n(ks[11], (cout,), jnp.float32),
        # attention2: SCSE(in_channels=cout)
        a2_wa=0.3 * n(ks[12], (cr2, cout), jnp.float32),
        a2_ba=0.1 * n(ks[13], (cr2,), jnp.float32),
        a2_wb=0.3 * n(ks[14], (cout, cr2), jnp.float32),
        a2_bb=0.1 * n(ks[15], (cout,), jnp.float32),
        a2_ws=0.3 * n(ks[16], (cout,), jnp.float32),
        a2_bs=0.1 * n(ks[17], (), jnp.float32),
    )


def reference(x, p):
    """Pure-JAX f32 reference with identical semantics (NCHW in / NCHW out)."""
    def scse(x, wa, ba, wb, bb, ws, bs):
        pool = jnp.mean(x, axis=(2, 3))                                   # (N,C)
        h = jax.nn.relu(pool @ wa.T + ba)
        c = jax.nn.sigmoid(h @ wb.T + bb)
        s = jax.nn.sigmoid(jnp.einsum('nchw,c->nhw', x, ws) + bs)
        return x * c[:, :, None, None] + x * s[:, None, :, :]

    def conv_bn_relu(x, w, g, b):
        y = jax.lax.conv_general_dilated(
            x, w, (1, 1), 'SAME', dimension_numbers=('NCHW', 'OIHW', 'NCHW'))
        mean = jnp.mean(y, axis=(0, 2, 3), keepdims=True)
        var = jnp.mean((y - mean) ** 2, axis=(0, 2, 3), keepdims=True)
        return jax.nn.relu((y - mean) * jax.lax.rsqrt(var + EPS)
                           * g[None, :, None, None] + b[None, :, None, None])

    x = x.astype(jnp.float32)
    x = scse(x, p['a1_wa'], p['a1_ba'], p['a1_wb'], p['a1_bb'], p['a1_ws'], p['a1_bs'])
    x = conv_bn_relu(x, p['cw1'], p['g1'], p['be1'])
    x = conv_bn_relu(x, p['cw2'], p['g2'], p['be2'])
    x = scse(x, p['a2_wa'], p['a2_ba'], p['a2_wb'], p['a2_bb'], p['a2_ws'], p['a2_bs'])
    return x


if __name__ == "__main__":
    # in_channels=16 (>= reduction=16 so the SCSE bottleneck is non-empty),
    # mid_channels=32, out_channels=16, batch=2, spatial=16x16.
    N, CIN, CMID, COUT, H, W = 2, 16, 32, 16, 16, 16
    key = jax.random.PRNGKey(0)
    kx, kp = jax.random.split(key)
    x = jax.random.normal(kx, (N, CIN, H, W), jnp.float32)   # NCHW, like PyTorch
    params = init_params(kp, CIN, CMID, COUT)

    out = jax.block_until_ready(conv_block(x, params))
    ref = jax.block_until_ready(reference(x, params))
    # bf16 MXU inputs + approximate-reciprocal sigmoid -> ~1e-3-level relative error.
    np.testing.assert_allclose(np.asarray(out), np.asarray(ref), rtol=5e-2, atol=5e-2)
    assert out.shape == (N, COUT, H, W)
    print("KERNEL_OK")
</pallas_src>

<mosaic_0001>
module attributes {stable_mosaic.version = 11 : i64} {
  func.func @_attn_conv1_kernel(%arg0: i32, %arg1: memref<1x16x256xf32, #tpu.memory_space<vmem>>, %arg2: memref<16x1xf32, #tpu.memory_space<vmem>>, %arg3: memref<1x1xf32, #tpu.memory_space<vmem>>, %arg4: memref<16x1xf32, #tpu.memory_space<vmem>>, %arg5: memref<16x1xf32, #tpu.memory_space<vmem>>, %arg6: memref<16x1xf32, #tpu.memory_space<vmem>>, %arg7: memref<1x1xf32, #tpu.memory_space<vmem>>, %arg8: memref<3x32x48xbf16, #tpu.memory_space<vmem>>, %arg9: memref<1x32x256xf32, #tpu.memory_space<vmem>>, %arg10: memref<1x32x2xf32, #tpu.memory_space<vmem>>, %arg11: memref<16x290xbf16, #tpu.memory_space<vmem>>) attributes {dimension_semantics = [#tpu.dimension_semantics<parallel>], iteration_bounds = array<i64: 2>, scalar_prefetch = 0 : i64, scratch_operands = 1 : i64, tpu.core_type = #tpu.core_type<tc>, window_params = [{transform_indices = @transform_0, window_bounds = array<i64: 1, 16, 256>}, {pipeline_mode = #tpu.pipeline_mode<synchronous>, transform_indices = @transform_1, window_bounds = array<i64: 16, 1>}, {pipeline_mode = #tpu.pipeline_mode<synchronous>, transform_indices = @transform_2, window_bounds = array<i64: 1, 1>}, {pipeline_mode = #tpu.pipeline_mode<synchronous>, transform_indices = @transform_3, window_bounds = array<i64: 16, 1>}, {pipeline_mode = #tpu.pipeline_mode<synchronous>, transform_indices = @transform_4, window_bounds = array<i64: 16, 1>}, {pipeline_mode = #tpu.pipeline_mode<synchronous>, transform_indices = @transform_5, window_bounds = array<i64: 16, 1>}, {pipeline_mode = #tpu.pipeline_mode<synchronous>, transform_indices = @transform_6, window_bounds = array<i64: 1, 1>}, {pipeline_mode = #tpu.pipeline_mode<synchronous>, transform_indices = @transform_7, window_bounds = array<i64: 3, 32, 48>}, {transform_indices = @transform_8, window_bounds = array<i64: 1, 32, 256>}, {transform_indices = @transform_9, window_bounds = array<i64: 1, 32, 2>}]} {
    %c0 = arith.constant 0 : index
    %c0_0 = arith.constant 0 : index
    %c0_1 = arith.constant 0 : index
    %0 = vector.load %arg1[%c0, %c0_0, %c0_1] : memref<1x16x256xf32, #tpu.memory_space<vmem>>, vector<1x16x256xf32>
    %1 = vector.shape_cast %0 : vector<1x16x256xf32> to vector<16x256xf32>
    %c0_2 = arith.constant 0 : index
    %c0_3 = arith.constant 0 : index
    %2 = vector.load %arg2[%c0_2, %c0_3] : memref<16x1xf32, #tpu.memory_space<vmem>>, vector<16x1xf32>
    %c0_4 = arith.constant 0 : index
    %c0_5 = arith.constant 0 : index
    %3 = vector.load %arg3[%c0_4, %c0_5] : memref<1x1xf32, #tpu.memory_space<vmem>>, vector<1x1xf32>
    %c0_6 = arith.constant 0 : index
    %c0_7 = arith.constant 0 : index
    %4 = vector.load %arg4[%c0_6, %c0_7] : memref<16x1xf32, #tpu.memory_space<vmem>>, vector<16x1xf32>
    %c0_8 = arith.constant 0 : index
    %c0_9 = arith.constant 0 : index
    %5 = vector.load %arg5[%c0_8, %c0_9] : memref<16x1xf32, #tpu.memory_space<vmem>>, vector<16x1xf32>
    %c0_10 = arith.constant 0 : index
    %c0_11 = arith.constant 0 : index
    %6 = vector.load %arg6[%c0_10, %c0_11] : memref<16x1xf32, #tpu.memory_space<vmem>>, vector<16x1xf32>
    %c0_12 = arith.constant 0 : index
    %c0_13 = arith.constant 0 : index
    %7 = vector.load %arg7[%c0_12, %c0_13] : memref<1x1xf32, #tpu.memory_space<vmem>>, vector<1x1xf32>
    %cst = arith.constant dense<0.000000e+00> : vector<16xf32>
    %8 = vector.multi_reduction <add>, %1, %cst [1] : vector<16x256xf32> to vector<16xf32>
    %9 = vector.shape_cast %8 : vector<16xf32> to vector<16x1xf32>
    %cst_14 = arith.constant 2.560000e+02 : f32
    %10 = vector.broadcast %cst_14 : f32 to vector<16x1xf32>
    %11 = arith.divf %9, %10 : vector<16x1xf32>
    %12 = arith.mulf %2, %11 : vector<16x1xf32>
    %cst_15 = arith.constant dense<0.000000e+00> : vector<1xf32>
    %13 = vector.multi_reduction <add>, %12, %cst_15 [0] : vector<16x1xf32> to vector<1xf32>
    %14 = vector.shape_cast %13 : vector<1xf32> to vector<1x1xf32>
    %15 = arith.addf %14, %3 : vector<1x1xf32>
    %cst_16 = arith.constant 0.000000e+00 : f32
    %16 = vector.broadcast %cst_16 : f32 to vector<1x1xf32>
    %17 = arith.maximumf %15, %16 : vector<1x1xf32>
    %18 = vector.broadcast %17 : vector<1x1xf32> to vector<16x1xf32>
    %19 = arith.mulf %4, %18 : vector<16x1xf32>
    %cst_17 = arith.constant dense<0.000000e+00> : vector<16xf32>
    %20 = vector.multi_reduction <add>, %19, %cst_17 [1] : vector<16x1xf32> to vector<16xf32>
    %21 = vector.shape_cast %20 : vector<16xf32> to vector<16x1xf32>
    %22 = arith.addf %21, %5 : vector<16x1xf32>
    %cst_18 = arith.constant 0.000000e+00 : f32
    %23 = vector.broadcast %cst_18 : f32 to vector<16x1xf32>
    %24 = arith.subf %23, %22 : vector<16x1xf32>
    %25 = math.exp %24 : vector<16x1xf32>
    %cst_19 = arith.constant 1.000000e+00 : f32
    %26 = vector.broadcast %cst_19 : f32 to vector<16x1xf32>
    %27 = arith.addf %26, %25 : vector<16x1xf32>
    %28 = tpu.reciprocal %27 {approx = true} : vector<16x1xf32> -> vector<16x1xf32>
    %29 = vector.broadcast %6 : vector<16x1xf32> to vector<16x256xf32>
    %30 = arith.mulf %1, %29 : vector<16x256xf32>
    %cst_20 = arith.constant dense<0.000000e+00> : vector<256xf32>
    %31 = vector.multi_reduction <add>, %30, %cst_20 [0] : vector<16x256xf32> to vector<256xf32>
    %32 = vector.shape_cast %31 : vector<256xf32> to vector<1x256xf32>
    %33 = vector.broadcast %7 : vector<1x1xf32> to vector<1x256xf32>
    %34 = arith.addf %32, %33 : vector<1x256xf32>
    %cst_21 = arith.constant 0.000000e+00 : f32
    %35 = vector.broadcast %cst_21 : f32 to vector<1x256xf32>
    %36 = arith.subf %35, %34 : vector<1x256xf32>
    %37 = math.exp %36 : vector<1x256xf32>
    %cst_22 = arith.constant 1.000000e+00 : f32
    %38 = vector.broadcast %cst_22 : f32 to vector<1x256xf32>
    %39 = arith.addf %38, %37 : vector<1x256xf32>
    %40 = tpu.reciprocal %39 {approx = true} : vector<1x256xf32> -> vector<1x256xf32>
    %41 = vector.broadcast %28 : vector<16x1xf32> to vector<16x256xf32>
    %42 = vector.broadcast %40 : vector<1x256xf32> to vector<16x256xf32>
    %43 = arith.addf %41, %42 : vector<16x256xf32>
    %44 = arith.mulf %1, %43 : vector<16x256xf32>
    %45 = arith.truncf %44 : vector<16x256xf32> to vector<16x256xbf16>
    %cst_23 = arith.constant 0.000000e+00 : bf16
    %46 = vector.broadcast %cst_23 : bf16 to vector<16x17xbf16>
    %c0_24 = arith.constant 0 : index
    %c0_25 = arith.constant 0 : index
    %47 = vector.load %arg11[%c0_24, %c0_25] : memref<16x290xbf16, #tpu.memory_space<vmem>>, vector<16x17xbf16>
    tpu.vector_store %arg11[%c0_24, %c0_25], %46 {strides = array<i32>} : memref<16x290xbf16, #tpu.memory_space<vmem>>, vector<16x17xbf16>,
    %c0_26 = arith.constant 0 : index
    %c273 = arith.constant 273 : index
    %48 = vector.load %arg11[%c0_26, %c273] : memref<16x290xbf16, #tpu.memory_space<vmem>>, vector<16x17xbf16>
    tpu.vector_store %arg11[%c0_26, %c273], %46 {strides = array<i32>} : memref<16x290xbf16, #tpu.memory_space<vmem>>, vector<16x17xbf16>,
    %c0_27 = arith.constant 0 : index
    %c17 = arith.constant 17 : index
    %49 = vector.load %arg11[%c0_27, %c17] : memref<16x290xbf16, #tpu.memory_space<vmem>>, vector<16x256xbf16>
    tpu.vector_store %arg11[%c0_27, %c17], %45 {strides = array<i32>} : memref<16x290xbf16, #tpu.memory_space<vmem>>, vector<16x256xbf16>,
    %50 = tpu.iota {dimensions = array<i32: 1>} : vector<1x256xi32>
    %c16_i32 = arith.constant 16 : i32
    %c0_i32 = arith.constant 0 : i32
    %51 = arith.cmpi eq, %c16_i32, %c0_i32 : i32
    %c1_i32 = arith.constant 1 : i32
    %52 = arith.select %51, %c1_i32, %c16_i32 : i32
    %53 = vector.broadcast %52 : i32 to vector<1x256xi32>
    %54 = arith.remsi %50, %53 : vector<1x256xi32>
    %c0_i32_28 = arith.constant 0 : i32
    %55 = vector.broadcast %c0_i32_28 : i32 to vector<1x256xi32>
    %56 = arith.cmpi ne, %54, %55 : vector<1x256xi32>
    %c0_i32_29 = arith.constant 0 : i32
    %57 = vector.broadcast %c0_i32_29 : i32 to vector<1x256xi32>
    %58 = arith.cmpi slt, %54, %57 : vector<1x256xi32>
    %c0_i32_30 = arith.constant 0 : i32
    %59 = arith.cmpi slt, %52, %c0_i32_30 : i32
    %60 = vector.broadcast %59 : i1 to vector<1x256xi1>
    %61 = vector.broadcast %60 : vector<1x256xi1> to vector<1x256xi1>
    %62 = arith.xori %58, %61 : vector<1x256xi1>
    %63 = arith.andi %62, %56 : vector<1x256xi1>
    %64 = vector.broadcast %52 : i32 to vector<1x256xi32>
    %65 = arith.addi %54, %64 : vector<1x256xi32>
    %66 = arith.select %63, %65, %54 : vector<1x256xi1>, vector<1x256xi32>
    %c0_i32_31 = arith.constant 0 : i32
    %67 = vector.broadcast %c0_i32_31 : i32 to vector<1x256xi32>
    %68 = arith.cmpi ne, %66, %67 : vector<1x256xi32>
    %c15_i32 = arith.constant 15 : i32
    %69 = vector.broadcast %c15_i32 : i32 to vector<1x256xi32>
    %70 = arith.cmpi ne, %66, %69 : vector<1x256xi32>
    %cst_32 = arith.constant 0.000000e+00 : f32
    %71 = vector.broadcast %cst_32 : f32 to vector<32x256xf32>
    %c0_33 = arith.constant 0 : index
    %c0_34 = arith.constant 0 : index
    %72 = vector.load %arg11[%c0_33, %c0_34] : memref<16x290xbf16, #tpu.memory_space<vmem>>, vector<16x256xbf16>
    %cst_35 = arith.constant 0.000000e+00 : bf16
    %73 = vector.broadcast %cst_35 : bf16 to vector<16x256xbf16>
    %74 = vector.shape_cast %68 : vector<1x256xi1> to vector<1x256xi1>
    %75 = vector.broadcast %74 : vector<1x256xi1> to vector<16x256xi1>
    %76 = arith.select %75, %72, %73 : vector<16x256xi1>, vector<16x256xbf16>
    %c0_36 = arith.constant 0 : index
    %c1 = arith.constant 1 : index
    %77 = vector.load %arg11[%c0_36, %c1] : memref<16x290xbf16, #tpu.memory_space<vmem>>, vector<16x256xbf16>
    %c0_37 = arith.constant 0 : index
    %c2 = arith.constant 2 : index
    %78 = vector.load %arg11[%c0_37, %c2] : memref<16x290xbf16, #tpu.memory_space<vmem>>, vector<16x256xbf16>
    %cst_38 = arith.constant 0.000000e+00 : bf16
    %79 = vector.broadcast %cst_38 : bf16 to vector<16x256xbf16>
    %80 = vector.shape_cast %70 : vector<1x256xi1> to vector<1x256xi1>
    %81 = vector.broadcast %80 : vector<1x256xi1> to vector<16x256xi1>
    %82 = arith.select %81, %78, %79 : vector<16x256xi1>, vector<16x256xbf16>
    %83 = tpu.concatenate %76, %77, %82 in 0 : vector<16x256xbf16>, vector<16x256xbf16>, vector<16x256xbf16> -> vector<48x256xbf16>
    %c0_39 = arith.constant 0 : index
    %c0_40 = arith.constant 0 : index
    %c0_41 = arith.constant 0 : index
    %84 = vector.load %arg8[%c0_39, %c0_40, %c0_41] : memref<3x32x48xbf16, #tpu.memory_space<vmem>>, vector<1x32x48xbf16>
    %85 = vector.shape_cast %84 : vector<1x32x48xbf16> to vector<32x48xbf16>
    %cst_42 = arith.constant dense<0.000000e+00> : vector<32x256xf32>
    %86 = tpu.matmul %85, %83, %cst_42 {dimension_numbers = #tpu.dot_dimension_numbers<[1], [0], [0], [1], [0, 0, 1, 1], [], []>} : vector<32x48xbf16>, vector<48x256xbf16>, vector<32x256xf32> -> vector<32x256xf32>
    %87 = arith.addf %71, %86 : vector<32x256xf32>
    %c0_43 = arith.constant 0 : index
    %c16 = arith.constant 16 : index
    %88 = vector.load %arg11[%c0_43, %c16] : memref<16x290xbf16, #tpu.memory_space<vmem>>, vector<16x256xbf16>
    %cst_44 = arith.constant 0.000000e+00 : bf16
    %89 = vector.broadcast %cst_44 : bf16 to vector<16x256xbf16>
    %90 = vector.shape_cast %68 : vector<1x256xi1> to vector<1x256xi1>
    %91 = vector.broadcast %90 : vector<1x256xi1> to vector<16x256xi1>
    %92 = arith.select %91, %88, %89 : vector<16x256xi1>, vector<16x256xbf16>
    %c0_45 = arith.constant 0 : index
    %c17_46 = arith.constant 17 : index
    %93 = vector.load %arg11[%c0_45, %c17_46] : memref<16x290xbf16, #tpu.memory_space<vmem>>, vector<16x256xbf16>
    %c0_47 = arith.constant 0 : index
    %c18 = arith.constant 18 : index
    %94 = vector.load %arg11[%c0_47, %c18] : memref<16x290xbf16, #tpu.memory_space<vmem>>, vector<16x256xbf16>
    %cst_48 = arith.constant 0.000000e+00 : bf16
    %95 = vector.broadcast %cst_48 : bf16 to vector<16x256xbf16>
    %96 = vector.shape_cast %70 : vector<1x256xi1> to vector<1x256xi1>
    %97 = vector.broadcast %96 : vector<1x256xi1> to vector<16x256xi1>
    %98 = arith.select %97, %94, %95 : vector<16x256xi1>, vector<16x256xbf16>
    %99 = tpu.concatenate %92, %93, %98 in 0 : vector<16x256xbf16>, vector<16x256xbf16>, vector<16x256xbf16> -> vector<48x256xbf16>
    %c1_49 = arith.constant 1 : index
    %c0_50 = arith.constant 0 : index
    %c0_51 = arith.constant 0 : index
    %100 = vector.load %arg8[%c1_49, %c0_50, %c0_51] : memref<3x32x48xbf16, #tpu.memory_space<vmem>>, vector<1x32x48xbf16>
    %101 = vector.shape_cast %100 : vector<1x32x48xbf16> to vector<32x48xbf16>
    %cst_52 = arith.constant dense<0.000000e+00> : vector<32x256xf32>
    %102 = tpu.matmul %101, %99, %cst_52 {dimension_numbers = #tpu.dot_dimension_numbers<[1], [0], [0], [1], [0, 0, 1, 1], [], []>} : vector<32x48xbf16>, vector<48x256xbf16>, vector<32x256xf32> -> vector<32x256xf32>
    %103 = arith.addf %87, %102 : vector<32x256xf32>
    %c0_53 = arith.constant 0 : index
    %c32 = arith.constant 32 : index
    %104 = vector.load %arg11[%c0_53, %c32] : memref<16x290xbf16, #tpu.memory_space<vmem>>, vector<16x256xbf16>
    %cst_54 = arith.constant 0.000000e+00 : bf16
    %105 = vector.broadcast %cst_54 : bf16 to vector<16x256xbf16>
    %106 = vector.shape_cast %68 : vector<1x256xi1> to vector<1x256xi1>
    %107 = vector.broadcast %106 : vector<1x256xi1> to vector<16x256xi1>
    %108 = arith.select %107, %104, %105 : vector<16x256xi1>, vector<16x256xbf16>
    %c0_55 = arith.constant 0 : index
    %c33 = arith.constant 33 : index
    %109 = vector.load %arg11[%c0_55, %c33] : memref<16x290xbf16, #tpu.memory_space<vmem>>, vector<16x256xbf16>
    %c0_56 = arith.constant 0 : index
    %c34 = arith.constant 34 : index
    %110 = vector.load %arg11[%c0_56, %c34] : memref<16x290xbf16, #tpu.memory_space<vmem>>, vector<16x256xbf16>
    %cst_57 = arith.constant 0.000000e+00 : bf16
    %111 = vector.broadcast %cst_57 : bf16 to vector<16x256xbf16>
    %112 = vector.shape_cast %70 : vector<1x256xi1> to vector<1x256xi1>
    %113 = vector.broadcast %112 : vector<1x256xi1> to vector<16x256xi1>
    %114 = arith.select %113, %110, %111 : vector<16x256xi1>, vector<16x256xbf16>
    %115 = tpu.concatenate %108, %109, %114 in 0 : vector<16x256xbf16>, vector<16x256xbf16>, vector<16x256xbf16> -> vector<48x256xbf16>
    %c2_58 = arith.constant 2 : index
    %c0_59 = arith.constant 0 : index
    %c0_60 = arith.constant 0 : index
    %116 = vector.load %arg8[%c2_58, %c0_59, %c0_60] : memref<3x32x48xbf16, #tpu.memory_space<vmem>>, vector<1x32x48xbf16>
    %117 = vector.shape_cast %116 : vector<1x32x48xbf16> to vector<32x48xbf16>
    %cst_61 = arith.constant dense<0.000000e+00> : vector<32x256xf32>
    %118 = tpu.matmul %117, %115, %cst_61 {dimension_numbers = #tpu.dot_dimension_numbers<[1], [0], [0], [1], [0, 0, 1, 1], [], []>} : vector<32x48xbf16>, vector<48x256xbf16>, vector<32x256xf32> -> vector<32x256xf32>
    %119 = arith.addf %103, %118 : vector<32x256xf32>
    %cst_62 = arith.constant dense<0.000000e+00> : vector<32xf32>
    %120 = vector.multi_reduction <add>, %119, %cst_62 [1] : vector<32x256xf32> to vector<32xf32>
    %121 = vector.shape_cast %120 : vector<32xf32> to vector<32x1xf32>
    %c0_63 = arith.constant 0 : index
    %c0_64 = arith.constant 0 : index
    %c0_65 = arith.constant 0 : index
    %122 = vector.load %arg10[%c0_63, %c0_64, %c0_65] : memref<1x32x2xf32, #tpu.memory_space<vmem>>, vector<1x32x1xf32>
    %123 = vector.shape_cast %122 : vector<1x32x1xf32> to vector<32x1xf32>
    %124 = vector.shape_cast %121 : vector<32x1xf32> to vector<1x32x1xf32>
    tpu.vector_store %arg10[%c0_63, %c0_64, %c0_65], %124 {strides = array<i32>} : memref<1x32x2xf32, #tpu.memory_space<vmem>>, vector<1x32x1xf32>,
    %125 = arith.mulf %119, %119 : vector<32x256xf32>
    %cst_66 = arith.constant dense<0.000000e+00> : vector<32xf32>
    %126 = vector.multi_reduction <add>, %125, %cst_66 [1] : vector<32x256xf32> to vector<32xf32>
    %127 = vector.shape_cast %126 : vector<32xf32> to vector<32x1xf32>
    %c0_67 = arith.constant 0 : index
    %c0_68 = arith.constant 0 : index
    %c1_69 = arith.constant 1 : index
    %128 = vector.load %arg10[%c0_67, %c0_68, %c1_69] : memref<1x32x2xf32, #tpu.memory_space<vmem>>, vector<1x32x1xf32>
    %129 = vector.shape_cast %128 : vector<1x32x1xf32> to vector<32x1xf32>
    %130 = vector.shape_cast %127 : vector<32x1xf32> to vector<1x32x1xf32>
    tpu.vector_store %arg10[%c0_67, %c0_68, %c1_69], %130 {strides = array<i32>} : memref<1x32x2xf32, #tpu.memory_space<vmem>>, vector<1x32x1xf32>,
    %c0_70 = arith.constant 0 : index
    %c0_71 = arith.constant 0 : index
    %c0_72 = arith.constant 0 : index
    %131 = vector.load %arg9[%c0_70, %c0_71, %c0_72] : memref<1x32x256xf32, #tpu.memory_space<vmem>>, vector<1x32x256xf32>
    %132 = vector.shape_cast %131 : vector<1x32x256xf32> to vector<32x256xf32>
    %133 = vector.shape_cast %119 : vector<32x256xf32> to vector<1x32x256xf32>
    tpu.vector_store %arg9[%c0_70, %c0_71, %c0_72], %133 {strides = array<i32>} : memref<1x32x256xf32, #tpu.memory_space<vmem>>, vector<1x32x256xf32>,
    return
  }
  func.func @transform_0(%arg0: i32) -> (i32, i32, i32) {
    %c0_i32 = arith.constant 0 : i32
    %c0_i32_0 = arith.constant 0 : i32
    %c0_i32_1 = arith.constant 0 : i32
    return %arg0, %c0_i32, %c0_i32_0 : i32, i32, i32
  }
  func.func @transform_1(%arg0: i32) -> (i32, i32) {
    %c0_i32 = arith.constant 0 : i32
    %c0_i32_0 = arith.constant 0 : i32
    %c0_i32_1 = arith.constant 0 : i32
    return %c0_i32, %c0_i32_0 : i32, i32
  }
  func.func @transform_2(%arg0: i32) -> (i32, i32) {
    %c0_i32 = arith.constant 0 : i32
    %c0_i32_0 = arith.constant 0 : i32
    %c0_i32_1 = arith.constant 0 : i32
    return %c0_i32, %c0_i32_0 : i32, i32
  }
  func.func @transform_3(%arg0: i32) -> (i32, i32) {
    %c0_i32 = arith.constant 0 : i32
    %c0_i32_0 = arith.constant 0 : i32
    %c0_i32_1 = arith.constant 0 : i32
    return %c0_i32, %c0_i32_0 : i32, i32
  }
  func.func @transform_4(%arg0: i32) -> (i32, i32) {
    %c0_i32 = arith.constant 0 : i32
    %c0_i32_0 = arith.constant 0 : i32
    %c0_i32_1 = arith.constant 0 : i32
    return %c0_i32, %c0_i32_0 : i32, i32
  }
  func.func @transform_5(%arg0: i32) -> (i32, i32) {
    %c0_i32 = arith.constant 0 : i32
    %c0_i32_0 = arith.constant 0 : i32
    %c0_i32_1 = arith.constant 0 : i32
    return %c0_i32, %c0_i32_0 : i32, i32
  }
  func.func @transform_6(%arg0: i32) -> (i32, i32) {
    %c0_i32 = arith.constant 0 : i32
    %c0_i32_0 = arith.constant 0 : i32
    %c0_i32_1 = arith.constant 0 : i32
    return %c0_i32, %c0_i32_0 : i32, i32
  }
  func.func @transform_7(%arg0: i32) -> (i32, i32, i32) {
    %c0_i32 = arith.constant 0 : i32
    %c0_i32_0 = arith.constant 0 : i32
    %c0_i32_1 = arith.constant 0 : i32
    %c0_i32_2 = arith.constant 0 : i32
    return %c0_i32, %c0_i32_0, %c0_i32_1 : i32, i32, i32
  }
  func.func @transform_8(%arg0: i32) -> (i32, i32, i32) {
    %c0_i32 = arith.constant 0 : i32
    %c0_i32_0 = arith.constant 0 : i32
    %c0_i32_1 = arith.constant 0 : i32
    return %arg0, %c0_i32, %c0_i32_0 : i32, i32, i32
  }
  func.func @transform_9(%arg0: i32) -> (i32, i32, i32) {
    %c0_i32 = arith.constant 0 : i32
    %c0_i32_0 = arith.constant 0 : i32
    %c0_i32_1 = arith.constant 0 : i32
    return %arg0, %c0_i32, %c0_i32_0 : i32, i32, i32
  }
}

</mosaic_0001>

<llo_original>
// kernel: tpu_custom_call.1
$region0: #{tpu_custom_call.1}
  #allocation0 [shape = 'u32[]', space=smem, size = 0x4, offset = 0x4, fixed_abs, tag = 'smem constant byte address 0x4 - core index']
  #allocation1 [shape = 'u32[144,128]{1,0:T(1,128)}', space=vmem, size = 0x12000, scoped, tag = 'internal scratch']
  #allocation2 [shape = 'bf16[16,290]{1,0:T(8,128)(2,1)}', space=vmem, size = 0x3000, scoped, tag = 'scratch operand']
  #allocation3 [shape = 'f32[1,1]{1,0:T(1,128)S(1)}', space=vmem, size = 0x200, scoped, tag = 'scoped memory for tpu_custom_call.1']
  #allocation4 [shape = 'f32[1,1]{1,0:T(1,128)S(1)}', space=vmem, size = 0x200, scoped, tag = 'scoped memory for tpu_custom_call.1']
  %s0 = inlined_call_operand.vmem [shape: f32[2,16,256], index: 0, kind: input, shape index: {}]
  %s1 = inlined_call_operand.vmem [shape: f32[16,1], index: 1, kind: input, shape index: {}]
  %s2 = inlined_call_operand.<no memory space> [shape: f32[1,1], index: 2, kind: input, shape index: {}]
  %s3 = inlined_call_operand.vmem [shape: f32[16,1], index: 3, kind: input, shape index: {}]
  %s4 = inlined_call_operand.vmem [shape: f32[16,1], index: 4, kind: input, shape index: {}]
  %s5 = inlined_call_operand.vmem [shape: f32[16,1], index: 5, kind: input, shape index: {}]
  %s6 = inlined_call_operand.<no memory space> [shape: f32[1,1], index: 6, kind: input, shape index: {}]
  %s7 = inlined_call_operand.hbm [shape: bf16[3,32,48], index: 7, kind: input, shape index: {}]
  %s8 = inlined_call_operand.hbm [shape: f32[2,32,256], index: 8, kind: output, shape index: {0}]
  %s9 = inlined_call_operand.vmem [shape: f32[2,32,2], index: 9, kind: output, shape index: {1}]
  %10 = xla_tuple %s8, %s9
  %s11 = sld [smem:[#allocation0]]
  $region77: #{tpu_custom_call.1} parent=0
    _
  %s13 = ssub.s32 1, %s11
  %s14 = scalar_select 0, %s13, %s11
  %v15 = vstv %s2
  %16 = vst [vmem:[#allocation3] sm:$0x1] %v15
  %v17 = vstv %s6
  %18 = vst [vmem:[#allocation4] sm:$0x1] %v17
  $region1: #{tpu_custom_call.1} parent=0
    #allocation5 [shape = 'u8[24576]{0}', space=vmem, size = 0x6000, scoped, tag = 'input window, operand 7, single buffered']
    #allocation6 [shape = 's32[2]{0}', space=sflag, size = 0x8, scoped, tag = 'scoped memory for tpu_custom_call.1']
    #allocation7 [shape = 's32[2]{0}', space=sflag, size = 0x8, scoped, tag = 'scoped memory for tpu_custom_call.1']
    #allocation8 [shape = 'u8[65536]{0}', space=vmem, size = 0x10000, scoped, tag = 'output window, operand 0']
    %19 = vsyncpa [#allocation6], 0
    %20 = vsyncpa [#allocation7], 0
    %s21 = scalar_lea.sflag [#allocation7], 1
    %22 = vsyncpa %s21, 0
    loop: start=0, step=1, limit=4
    $region2: #{tpu_custom_call.1} parent=1 // loop_pre_header
      _
    $region3: #{tpu_custom_call.1} parent=1 // loop_header
      %s24 = sphi 0, %s28
      %p25 = scmp.ge.s32.totalorder %s24, 4
      %s34 = sphi 0, %s36
      %s37 = sphi 0, %s34
      %s38 = sphi 0, %s37
      %s54 = sphi 0, %s38
      %s58 = sphi 0, %s58
      %s60 = sphi 0, %s58
      %s61 = sphi 0, %s60
      %s75 = sphi 0, %s61
      %s79 = sphi 0, %s79
      %s81 = sphi 0, %s79
      %s82 = sphi 0, %s81
      %s96 = sphi 0, %s82
      %s100 = sphi 0, %s100
      %s102 = sphi 0, %s100
      %s103 = sphi 0, %s102
      %s117 = sphi 0, %s103
      %s121 = sphi 0, %s121
      %s123 = sphi 0, %s121
      %s124 = sphi 0, %s123
      %s138 = sphi 0, %s124
      %s142 = sphi 0, %s142
      %s144 = sphi 0, %s142
      %s145 = sphi 0, %s144
      %s159 = sphi 0, %s145
      %s163 = sphi 0, %s163
      %s165 = sphi 0, %s163
      %s166 = sphi 0, %s165
      %s180 = sphi 0, %s166
      %s184 = sphi 0, %s184
      %s186 = sphi 0, %s184
      %s187 = sphi 0, %s186
      %s201 = sphi 0, %s187
      %s207 = sphi 0, %s209
      %s210 = sphi 0, %s207
      %s211 = sphi 0, %s210
      %s227 = sphi 0, %s211
      %s233 = sphi 0, %s235
      %s236 = sphi 0, %s233
      %s237 = sphi 0, %s236
      %s253 = sphi 0, %s237
    $region4: #{tpu_custom_call.1} parent=1 // loop_header_branch
      %27 = sbr.rel (%p25) target = $region8
    $region5: #{tpu_custom_call.1} parent=1 // loop_body
      %s29 = ssub.s32 %s24, 1
      %s30 = ssub.s32 %s24, 2
      %s31 = sadd.s32 %s24, 1
      %s32 = ssub.s32 %s24, %s31
      %p33 = scmp.eq.s32.totalorder %s32, 0
      %s35 = sadd.s32 %s34, 1
      %s36 = scalar_select %p33, %s34, %s35
      %p39 = pneg %p33
      %p40 = scmp.eq.s32.totalorder %s24, 1
      %p41 = por %p39, %p40
      %p42 = scmp.ne.s32.totalorder %s34, %s37
      %p43 = scmp.eq.s32.totalorder %s24, 0
      %p44 = por %p42, %p43
      %p45 = scmp.ne.s32.totalorder %s34, %s37
      %p46 = scmp.eq.s32.totalorder %s29, 1
      %p47 = por %p45, %p46
      %p48 = scmp.ne.s32.totalorder %s37, %s38
      %p49 = scmp.eq.s32.totalorder %s29, 0
      %p50 = por %p48, %p49
      %p51 = scmp.ne.s32.totalorder %s37, %s38
      %p52 = scmp.eq.s32.totalorder %s30, 1
      %p53 = por %p51, %p52
      %p55 = scmp.ne.s32.totalorder %s38, %s54
      %p56 = scmp.eq.s32.totalorder %s30, 0
      %p57 = por %p55, %p56
      %s59 = sadd.s32 %s58, 1
      %p62 = scmp.eq.s32.totalorder %s24, 1
      %p63 = scmp.ne.s32.totalorder %s58, %s60
      %p64 = scmp.eq.s32.totalorder %s24, 0
      %p65 = por %p63, %p64
      %p66 = scmp.ne.s32.totalorder %s58, %s60
      %p67 = scmp.eq.s32.totalorder %s29, 1
      %p68 = por %p66, %p67
      %p69 = scmp.ne.s32.totalorder %s60, %s61
      %p70 = scmp.eq.s32.totalorder %s29, 0
      %p71 = por %p69, %p70
      %p72 = scmp.ne.s32.totalorder %s60, %s61
      %p73 = scmp.eq.s32.totalorder %s30, 1
      %p74 = por %p72, %p73
      %p76 = scmp.ne.s32.totalorder %s61, %s75
      %p77 = scmp.eq.s32.totalorder %s30, 0
      %p78 = por %p76, %p77
      %s80 = sadd.s32 %s79, 1
      %p83 = scmp.eq.s32.totalorder %s24, 1
      %p84 = scmp.ne.s32.totalorder %s79, %s81
      %p85 = scmp.eq.s32.totalorder %s24, 0
      %p86 = por %p84, %p85
      %p87 = scmp.ne.s32.totalorder %s79, %s81
      %p88 = scmp.eq.s32.totalorder %s29, 1
      %p89 = por %p87, %p88
      %p90 = scmp.ne.s32.totalorder %s81, %s82
      %p91 = scmp.eq.s32.totalorder %s29, 0
      %p92 = por %p90, %p91
      %p93 = scmp.ne.s32.totalorder %s81, %s82
      %p94 = scmp.eq.s32.totalorder %s30, 1
      %p95 = por %p93, %p94
      %p97 = scmp.ne.s32.totalorder %s82, %s96
      %p98 = scmp.eq.s32.totalorder %s30, 0
      %p99 = por %p97, %p98
      %s101 = sadd.s32 %s100, 1
      %p104 = scmp.eq.s32.totalorder %s24, 1
      %p105 = scmp.ne.s32.totalorder %s100, %s102
      %p106 = scmp.eq.s32.totalorder %s24, 0
      %p107 = por %p105, %p106
      %p108 = scmp.ne.s32.totalorder %s100, %s102
      %p109 = scmp.eq.s32.totalorder %s29, 1
      %p110 = por %p108, %p109
      %p111 = scmp.ne.s32.totalorder %s102, %s103
      %p112 = scmp.eq.s32.totalorder %s29, 0
      %p113 = por %p111, %p112
      %p114 = scmp.ne.s32.totalorder %s102, %s103
      %p115 = scmp.eq.s32.totalorder %s30, 1
      %p116 = por %p114, %p115
      %p118 = scmp.ne.s32.totalorder %s103, %s117
      %p119 = scmp.eq.s32.totalorder %s30, 0
      %p120 = por %p118, %p119
      %s122 = sadd.s32 %s121, 1
      %p125 = scmp.eq.s32.totalorder %s24, 1
      %p126 = scmp.ne.s32.totalorder %s121, %s123
      %p127 = scmp.eq.s32.totalorder %s24, 0
      %p128 = por %p126, %p127
      %p129 = scmp.ne.s32.totalorder %s121, %s123
      %p130 = scmp.eq.s32.totalorder %s29, 1
      %p131 = por %p129, %p130
      %p132 = scmp.ne.s32.totalorder %s123, %s124
      %p133 = scmp.eq.s32.totalorder %s29, 0
      %p134 = por %p132, %p133
      %p135 = scmp.ne.s32.totalorder %s123, %s124
      %p136 = scmp.eq.s32.totalorder %s30, 1
      %p137 = por %p135, %p136
      %p139 = scmp.ne.s32.totalorder %s124, %s138
      %p140 = scmp.eq.s32.totalorder %s30, 0
      %p141 = por %p139, %p140
      %s143 = sadd.s32 %s142, 1
      %p146 = scmp.eq.s32.totalorder %s24, 1
      %p147 = scmp.ne.s32.totalorder %s142, %s144
      %p148 = scmp.eq.s32.totalorder %s24, 0
      %p149 = por %p147, %p148
      %p150 = scmp.ne.s32.totalorder %s142, %s144
      %p151 = scmp.eq.s32.totalorder %s29, 1
      %p152 = por %p150, %p151
      %p153 = scmp.ne.s32.totalorder %s144, %s145
      %p154 = scmp.eq.s32.totalorder %s29, 0
      %p155 = por %p153, %p154
      %p156 = scmp.ne.s32.totalorder %s144, %s145
      %p157 = scmp.eq.s32.totalorder %s30, 1
      %p158 = por %p156, %p157
      %p160 = scmp.ne.s32.totalorder %s145, %s159
      %p161 = scmp.eq.s32.totalorder %s30, 0
      %p162 = por %p160, %p161
      %s164 = sadd.s32 %s163, 1
      %p167 = scmp.eq.s32.totalorder %s24, 1
      %p168 = scmp.ne.s32.totalorder %s163, %s165
      %p169 = scmp.eq.s32.totalorder %s24, 0
      %p170 = por %p168, %p169
      %p171 = scmp.ne.s32.totalorder %s163, %s165
      %p172 = scmp.eq.s32.totalorder %s29, 1
      %p173 = por %p171, %p172
      %p174 = scmp.ne.s32.totalorder %s165, %s166
      %p175 = scmp.eq.s32.totalorder %s29, 0
      %p176 = por %p174, %p175
      %p177 = scmp.ne.s32.totalorder %s165, %s166
      %p178 = scmp.eq.s32.totalorder %s30, 1
      %p179 = por %p177, %p178
      %p181 = scmp.ne.s32.totalorder %s166, %s180
      %p182 = scmp.eq.s32.totalorder %s30, 0
      %p183 = por %p181, %p182
      %s185 = sadd.s32 %s184, 1
      %p188 = scmp.eq.s32.totalorder %s24, 1
      %p189 = scmp.ne.s32.totalorder %s184, %s186
      %p190 = scmp.eq.s32.totalorder %s24, 0
      %p191 = por %p189, %p190
      %p192 = scmp.ne.s32.totalorder %s184, %s186
      %p193 = scmp.eq.s32.totalorder %s29, 1
      %p194 = por %p192, %p193
      %p195 = scmp.ne.s32.totalorder %s186, %s187
      %p196 = scmp.eq.s32.totalorder %s29, 0
      %p197 = por %p195, %p196
      %p198 = scmp.ne.s32.totalorder %s186, %s187
      %p199 = scmp.eq.s32.totalorder %s30, 1
      %p200 = por %p198, %p199
      %p202 = scmp.ne.s32.totalorder %s187, %s201
      %p203 = scmp.eq.s32.totalorder %s30, 0
      %p204 = por %p202, %p203
      %s205 = ssub.s32 %s24, %s31
      %p206 = scmp.eq.s32.totalorder %s205, 0
      %s208 = sadd.s32 %s207, 1
      %s209 = scalar_select %p206, %s207, %s208
      %p212 = pneg %p206
      %p213 = scmp.eq.s32.totalorder %s24, 1
      %p214 = por %p212, %p213
      %p215 = scmp.ne.s32.totalorder %s207, %s210
      %p216 = scmp.eq.s32.totalorder %s24, 0
      %p217 = por %p215, %p216
      %p218 = scmp.ne.s32.totalorder %s207, %s210
      %p219 = scmp.eq.s32.totalorder %s29, 1
      %p220 = por %p218, %p219
      %p221 = scmp.ne.s32.totalorder %s210, %s211
      %p222 = scmp.eq.s32.totalorder %s29, 0
      %p223 = por %p221, %p222
      %p224 = scmp.ne.s32.totalorder %s210, %s211
      %p225 = scmp.eq.s32.totalorder %s30, 1
      %p226 = por %p224, %p225
      %p228 = scmp.ne.s32.totalorder %s211, %s227
      %p229 = scmp.eq.s32.totalorder %s30, 0
      %p230 = por %p228, %p229
      %s231 = ssub.s32 %s24, %s31
      %p232 = scmp.eq.s32.totalorder %s231, 0
      %s234 = sadd.s32 %s233, 1
      %s235 = scalar_select %p232, %s233, %s234
      %p238 = pneg %p232
      %p239 = scmp.eq.s32.totalorder %s24, 1
      %p240 = por %p238, %p239
      %p241 = scmp.ne.s32.totalorder %s233, %s236
      %p242 = scmp.eq.s32.totalorder %s24, 0
      %p243 = por %p241, %p242
      %p244 = scmp.ne.s32.totalorder %s233, %s236
      %p245 = scmp.eq.s32.totalorder %s29, 1
      %p246 = por %p244, %p245
      %p247 = scmp.ne.s32.totalorder %s236, %s237
      %p248 = scmp.eq.s32.totalorder %s29, 0
      %p249 = por %p247, %p248
      %p250 = scmp.ne.s32.totalorder %s236, %s237
      %p251 = scmp.eq.s32.totalorder %s30, 1
      %p252 = por %p250, %p251
      %p254 = scmp.ne.s32.totalorder %s237, %s253
      %p255 = scmp.eq.s32.totalorder %s30, 0
      %p256 = por %p254, %p255
      %p257 = scmp.le.s32.totalorder 1, %s24
      %p258 = scmp.lt.s32.totalorder %s24, 3
      %p259 = pnand %p257, %p258
      %p260 = pneg %p259
      // Predicated region
      $region9: #{tpu_custom_call.1} parent=5 // pred_check
        _
      $region10: #{tpu_custom_call.1} parent=5 // pred_check_branch
        %262 = sbr.rel (%p259) target = $region12
      $region11: #{tpu_custom_call.1} parent=5 // pred_region
        %s263 = ssub.s32 %s24, 1
        // Predicated region
        $region13: #{tpu_custom_call.1} parent=11 // pred_check
          %p264 = pneg %p71
        $region14: #{tpu_custom_call.1} parent=11 // pred_check_branch
          %266 = sbr.rel (%p264) target = $region16
        $region15: #{tpu_custom_call.1} parent=11 // pred_region
          _
        $region16: #{tpu_custom_call.1} parent=11 // pred_fallthru
          _
        // Predicated region
        $region17: #{tpu_custom_call.1} parent=11 // pred_check
          %p267 = pneg %p92
        $region18: #{tpu_custom_call.1} parent=11 // pred_check_branch
          %269 = sbr.rel (%p267) target = $region20
        $region19: #{tpu_custom_call.1} parent=11 // pred_region
          _
        $region20: #{tpu_custom_call.1} parent=11 // pred_fallthru
          _
        // Predicated region
        $region21: #{tpu_custom_call.1} parent=11 // pred_check
          %p270 = pneg %p113
        $region22: #{tpu_custom_call.1} parent=11 // pred_check_branch
          %272 = sbr.rel (%p270) target = $region24
        $region23: #{tpu_custom_call.1} parent=11 // pred_region
          _
        $region24: #{tpu_custom_call.1} parent=11 // pred_fallthru
          _
        // Predicated region
        $region25: #{tpu_custom_call.1} parent=11 // pred_check
          %p273 = pneg %p134
        $region26: #{tpu_custom_call.1} parent=11 // pred_check_branch
          %275 = sbr.rel (%p273) target = $region28
        $region27: #{tpu_custom_call.1} parent=11 // pred_region
          _
        $region28: #{tpu_custom_call.1} parent=11 // pred_fallthru
          _
        // Predicated region
        $region29: #{tpu_custom_call.1} parent=11 // pred_check
          %p276 = pneg %p155
        $region30: #{tpu_custom_call.1} parent=11 // pred_check_branch
          %278 = sbr.rel (%p276) target = $region32
        $region31: #{tpu_custom_call.1} parent=11 // pred_region
          _
        $region32: #{tpu_custom_call.1} parent=11 // pred_fallthru
          _
        // Predicated region
        $region33: #{tpu_custom_call.1} parent=11 // pred_check
          %p279 = pneg %p176
        $region34: #{tpu_custom_call.1} parent=11 // pred_check_branch
          %281 = sbr.rel (%p279) target = $region36
        $region35: #{tpu_custom_call.1} parent=11 // pred_region
          _
        $region36: #{tpu_custom_call.1} parent=11 // pred_fallthru
          _
        // Predicated region
        $region37: #{tpu_custom_call.1} parent=11 // pred_check
          %p282 = pneg %p197
        $region38: #{tpu_custom_call.1} parent=11 // pred_check_branch
          %284 = sbr.rel (%p282) target = $region40
        $region39: #{tpu_custom_call.1} parent=11 // pred_region
          %s286 = ssub.s32 768, 768
          %287 = vsyncadd [#allocation6], %s286
          %s288 = sshll.u32 [#allocation5], 4
          %s289 = int_to_ptr.vmem [resolvable:$true] %s288
          %294 = dma.hbm_to_vmem [thread:$0]  %s7, 768, %s289, [#allocation6], 64, 64, 4
        $region40: #{tpu_custom_call.1} parent=11 // pred_fallthru
          _
      $region12: #{tpu_custom_call.1} parent=5 // pred_fallthru
        _
      %p295 = scmp.lt.s32.totalorder %s24, 2
      // Predicated region
      $region41: #{tpu_custom_call.1} parent=5 // pred_check
        %p296 = pneg %p295
      $region42: #{tpu_custom_call.1} parent=5 // pred_check_branch
        %298 = sbr.rel (%p296) target = $region44
      $region43: #{tpu_custom_call.1} parent=5 // pred_region
        // Predicated region
        $region45: #{tpu_custom_call.1} parent=43 // pred_check
          %p299 = pneg %p44
        $region46: #{tpu_custom_call.1} parent=43 // pred_check_branch
          %301 = sbr.rel (%p299) target = $region48
        $region47: #{tpu_custom_call.1} parent=43 // pred_region
          %p302 = scmp.lt.s32.totalorder %s24, 1
          %s303 = scalar_select %p302, %s24, 1
          %s304 = smul.addr %s303, 4
          %s305 = smul.addr %s304, 8
          %s306 = scalar_lea.vmem %s0, %s305
        $region48: #{tpu_custom_call.1} parent=43 // pred_fallthru
          _
      $region44: #{tpu_custom_call.1} parent=5 // pred_fallthru
        _
      %p307 = scmp.le.s32.totalorder 1, %s24
      %p308 = scmp.lt.s32.totalorder %s24, 3
      %p309 = pnand %p307, %p308
      %p310 = pneg %p309
      // Predicated region
      $region49: #{tpu_custom_call.1} parent=5 // pred_check
        _
      $region50: #{tpu_custom_call.1} parent=5 // pred_check_branch
        %312 = sbr.rel (%p309) target = $region52
      $region51: #{tpu_custom_call.1} parent=5 // pred_region
        %s313 = ssub.s32 %s24, 1
        // Predicated region
        $region53: #{tpu_custom_call.1} parent=51 // pred_check
          %p314 = pneg %p197
        $region54: #{tpu_custom_call.1} parent=51 // pred_check_branch
          %316 = sbr.rel (%p314) target = $region56
        $region55: #{tpu_custom_call.1} parent=51 // pred_region
          %317 = dma.done [#allocation6], 768
        $region56: #{tpu_custom_call.1} parent=51 // pred_fallthru
          _
        %p318 = scmp.lt.s32.totalorder %s29, 1
        %s319 = scalar_select %p318, %s29, 1
        %s320 = smul.addr %s319, 4
        %s321 = smul.addr %s320, 8
        %s322 = scalar_lea.vmem %s0, %s321
        %p323 = pneg %p50
        %p324 = pneg %p47
        %p325 = pneg %p71
        %p326 = pneg %p68
        %p327 = pneg %p92
        %p328 = pneg %p89
        %p329 = pneg %p113
        %p330 = pneg %p110
        %p331 = pneg %p134
        %p332 = pneg %p131
        %p333 = pneg %p155
        %p334 = pneg %p152
        %p335 = pneg %p176
        %p336 = pneg %p173
        %p337 = pneg %p197
        %p338 = pneg %p194
        %p339 = pneg %p223
        %p340 = pneg %p220
        %s341 = sand.u32 %s210, 1
        %s342 = scalar_lea.sflag [#allocation7], %s341
        %s343 = sand.u32 %s210, 1
        %s344 = smul.addr %s343, 64
        %s345 = scalar_lea.vmem [#allocation8], %s344
        %p346 = pneg %p249
        %p347 = pneg %p246
        %p348 = scmp.lt.s32.totalorder %s29, 1
        %s349 = scalar_select %p348, %s29, 1
        %s350 = smul.addr %s349, 4
        %s351 = smul.addr %s350, 8
        %s352 = scalar_lea.vmem %s9, %s351
        %p353 = scmp.lt.s32.totalorder %s29, 1
        %s354 = scalar_select %p353, %s29, 1
        %s355 = smul.addr %s354, 4
        %s356 = smul.addr %s355, 8
        %s357 = scalar_lea.vmem %s0, %s356
        %p358 = scmp.lt.s32.totalorder %s29, 1
        %s359 = scalar_select %p358, %s29, 1
        %s360 = smul.addr %s359, 4
        %s361 = smul.addr %s360, 8
        %s362 = scalar_lea.vmem %s9, %s361
        %v366 = vld [vmem:[%s357] sm:$0xff]
        %v367 = vld [vmem:[%s357 + $0x8] sm:$0xff]
        %v368 = vld [vmem:[%s357 + $0x10] sm:$0xff]
        %v369 = vld [vmem:[%s357 + $0x18] sm:$0xff]
        %v370 = vld [vmem:[%s1] sm:$0xff]
        %v371 = vld [vmem:[%s1 + $0x8] sm:$0xff]
        %v372 = vld [vmem:[#allocation3] sm:$0x1]
        %v373 = vld [vmem:[%s3] sm:$0xff]
        %v374 = vld [vmem:[%s3 + $0x8] sm:$0xff]
        %v375 = vld [vmem:[%s4] sm:$0xff]
        %v376 = vld [vmem:[%s4 + $0x8] sm:$0xff]
        %v377 = vld [vmem:[%s5] sm:$0xff]
        %v378 = vld [vmem:[%s5 + $0x8] sm:$0xff]
        %v379 = vld [vmem:[#allocation4] sm:$0x1]
        %v380 = vadd.f32 %v366, %v367
        %381 = vadd.xlane.f32.xlu0 %v380
        %v382 = vpop.xlane.xlu0 %381
        %v383 = vadd.f32 %v368, %v369
        %384 = vadd.xlane.f32.xlu0 %v383
        %v385 = vpop.xlane.xlu0 %384
        %v386 = vrcp.pop 256.0
        %v387 = vmul.f32 %v382, %v386
        %v388 = vmul.f32 %v385, %v386
        %v389 = vmul.f32 %v370, %v387
        %v390 = vmul.f32 %v371, %v388
        %vm391 = vcmask 7168
        %v392 = vsel %vm391, %v389, 0.0
        %v393 = vsel %vm391, %v390, 0.0
        %v394 = vadd.f32 %v392, %v393
        %v395 = vrot.slane %v394, 4
        %v396 = vadd.f32 %v394, %v395
        %v397 = vrot.slane %v396, 2
        %v398 = vadd.f32 %v396, %v397
        %v399 = vrot.slane %v398, 1
        %v400 = vadd.f32 %v398, %v399
        %v401 = vadd.f32 %v400, %v372
        %v402 = vmax.f32 %v401, 0.0
        %v403 = vlaneseq
        %v404 = vshrl.u32 %v403, 7
        %v405 = vsub.s32 0, %v404
        %v406 = vrot.slane %v402, %v405
        %v407 = vmul.f32 %v373, %v406
        %v408 = vmul.f32 %v374, %v406
        %v409 = vadd.f32 %v407, 0.0
        %v410 = vadd.f32 %v408, 0.0
        %v411 = vadd.f32 %v409, %v375
        %v412 = vadd.f32 %v410, %v376
        %v413 = vsub.f32 0.0, %v411
        %v414 = vsub.f32 0.0, %v412
        %v415 = vmul.f32 %v413, 1.442695
        %v416 = vpow.pop %v415
        %v417 = vmul.f32 %v414, 1.442695
        %v418 = vpow.pop %v417
        %v419 = vadd.f32 %v416, 1.0
        %v420 = vadd.f32 %v418, 1.0
        %v421 = vrcp.pop %v419
        %v422 = vrcp.pop %v420
        %424 = vset.pattern.permute.xlu0 0
        %425 = vperm.xlu0 %424, %v377
        %v426 = vpop.permute.xlu0 %425
        %429 = vset.pattern.permute.xlu0 0
        %430 = vperm.xlu0 %429, %v378
        %v431 = vpop.permute.xlu0 %430
        %v433 = vmul.f32 %v366, %v426
        %v434 = vmul.f32 %v367, %v426
        %v435 = vmul.f32 %v368, %v431
        %v436 = vmul.f32 %v369, %v431
        %v437 = vadd.f32 %v433, %v435
        %v438 = vrot.slane %v437, 4
        %v439 = vadd.f32 %v437, %v438
        %v440 = vrot.slane %v439, 2
        %v441 = vadd.f32 %v439, %v440
        %v442 = vrot.slane %v441, 1
        %v443 = vadd.f32 %v441, %v442
        %v444 = vadd.f32 %v434, %v436
        %v445 = vrot.slane %v444, 4
        %v446 = vadd.f32 %v444, %v445
        %v447 = vrot.slane %v446, 2
        %v448 = vadd.f32 %v446, %v447
        %v449 = vrot.slane %v448, 1
        %v450 = vadd.f32 %v448, %v449
        %452 = vset.pattern.permute.xlu0 0
        %453 = vperm.xlu0 %452, %v379
        %v454 = vpop.permute.xlu0 %453
        %v456 = vlaneseq
        %v457 = vshrl.u32 %v456, 7
        %v458 = vsub.s32 0, %v457
        %v459 = vrot.slane %v454, %v458
        %v460 = vadd.f32 %v443, %v459
        %v461 = vadd.f32 %v450, %v459
        %v462 = vsub.f32 0.0, %v460
        %v463 = vsub.f32 0.0, %v461
        %v464 = vmul.f32 %v462, 1.442695
        %v465 = vpow.pop %v464
        %v466 = vmul.f32 %v463, 1.442695
        %v467 = vpow.pop %v466
        %v468 = vadd.f32 %v465, 1.0
        %v469 = vadd.f32 %v467, 1.0
        %v470 = vrcp.pop %v468
        %v471 = vrcp.pop %v469
        %473 = vset.pattern.permute.xlu0 0
        %474 = vperm.xlu0 %473, %v421
        %v475 = vpop.permute.xlu0 %474
        %478 = vset.pattern.permute.xlu0 0
        %479 = vperm.xlu0 %478, %v422
        %v480 = vpop.permute.xlu0 %479
        %v482 = vadd.f32 %v475, %v470
        %v483 = vadd.f32 %v475, %v471
        %v484 = vadd.f32 %v480, %v470
        %v485 = vadd.f32 %v480, %v471
        %v486 = vmul.f32 %v366, %v482
        %v487 = vmul.f32 %v367, %v483
        %v488 = vmul.f32 %v368, %v484
        %v489 = vmul.f32 %v369, %v485
        %v490 = vpack.c.bf16 %v488, %v486
        %v491 = vpack.c.bf16 %v489, %v487
        %vm492 = vcmask 134144
        %493 = vst.msk [vmem:[#allocation2] sm:$0xf] %vm492, 0
        %494 = vst.msk [vmem:[#allocation2 + $0xc] sm:$0xf] %vm492, 0
        %vm495 = vcmask 273544
        %496 = vst.msk [vmem:[#allocation2 + $0x8] sm:$0xf] %vm495, 0
        %497 = vst.msk [vmem:[#allocation2 + $0x14] sm:$0xf] %vm495, 0
        %v500 = vunpack.c.l.b16 %v490
        %v501 = vunpack.c.l.b16 %v491
        %v502 = vunpack.c.h.b16 %v490
        %v503 = vunpack.c.h.b16 %v491
        %v504 = vpack.c.b16 %v501, %v500
        %v505 = vpack.c.b16 %v503, %v502
        %506 = vrot.lane.b32.xlu0 %v504, 17
        %v507 = vpop.permute.xlu0 %506
        %508 = vrot.lane.b32.xlu0 %v505, 17
        %v509 = vpop.permute.xlu0 %508
        %v510 = vrot.slane %v507, 4
        %v511 = vrot.slane %v509, 4
        %vm512 = vcmask 138240
        %v513 = vsel %vm512, %v510, %v507
        %v514 = vsel %vm512, %v511, %v509
        %vm519 = vcmask 1043592
        %vm520 = vcmask 1047556
        %vm521 = vmor %vm520, %vm519
        %522 = vst.msk [vmem:[#allocation2] sm:$0xff] %vm521, %v513
        %523 = vst.msk [vmem:[#allocation2 + $0x8] sm:$0xf] %vm492, %v510
        %524 = vst.msk [vmem:[#allocation2 + $0xc] sm:$0xff] %vm521, %v514
        %525 = vst.msk [vmem:[#allocation2 + $0x14] sm:$0xf] %vm492, %v511
        %v526 = vlaneseq
        %v527 = vand.u32 %v526, 127
        %v528 = vadd.s32 %v527, 128
        %vm529 = vcmp.lt.s32.totalorder %v527, 0
        %v530 = vsub.s32 0, %v527
        %v531 = vsel %vm529, %v530, %v527
        %v532 = vshrl.u32 %v531, 4
        %v533 = vand.u32 %v531, 15
        %v534 = vsub.s32 0, %v533
        %v535 = vsel %vm529, %v534, %v533
        %vm536 = vcmp.lt.s32.totalorder %v528, 0
        %v537 = vsub.s32 0, %v528
        %v538 = vsel %vm536, %v537, %v528
        %v539 = vshrl.u32 %v538, 4
        %v540 = vand.u32 %v538, 15
        %v541 = vsub.s32 0, %v540
        %v542 = vsel %vm536, %v541, %v540
        %vm543 = vcmp.ne.s32.totalorder %v535, 0
        %vm544 = vcmp.ne.s32.totalorder %v542, 0
        %vm545 = vcmp.lt.s32.totalorder %v535, 0
        %vm546 = vcmp.lt.s32.totalorder %v542, 0
        %vm547 = vmand %vm545, %vm543
        %vm548 = vmand %vm546, %vm544
        %v549 = vadd.s32 %v535, 16
        %v550 = vadd.s32 %v542, 16
        %v551 = vsel %vm547, %v549, %v535
        %v552 = vsel %vm548, %v550, %v542
        %vm553 = vcmp.ne.s32.totalorder %v551, 0
        %vm554 = vcmp.ne.s32.totalorder %v552, 0
        %vm555 = vcmp.ne.s32.totalorder %v551, 15
        %vm556 = vcmp.ne.s32.totalorder %v552, 15
        %v557 = vld [vmem:[#allocation2] sm:$0xff]
        %v558 = vld [vmem:[#allocation2 + $0xc] sm:$0xff]
        %v559 = vsel %vm553, 1, 0
        %v560 = vsel %vm554, 1, 0
        %vm561 = vcmp.eq.s32.totalorder %v559, 1
        %vm562 = vcmp.eq.s32.totalorder %v560, 1
        %vm563 = vmpackc.low %vm562, %vm561
        %v564 = vsel %vm563, %v557, 0
        %v565 = vsel %vm563, %v558, 0
        %v566 = vld [vmem:[#allocation2 + $0x8] sm:$0xf]
        %v567 = vld [vmem:[#allocation2 + $0x14] sm:$0xf]
        %v568 = vsel %vm555, 1, 0
        %v569 = vsel %vm556, 1, 0
        %vm570 = vcmp.eq.s32.totalorder %v568, 1
        %vm571 = vcmp.eq.s32.totalorder %v569, 1
        %vm572 = vmpackc.low %vm571, %vm570
        %v573 = vsel %vm572, 65537, 0
        %574 = vrot.lane.b32.xlu0 %v573, 2
        %v575 = vpop.permute.xlu0 %574
        %v576 = vrot.slane %v575, 4
        %vm577 = vcmask 15360
        %v578 = vsel %vm577, %v576, %v575
        %vm579 = vcmp.ne.s16.totalorder %v578, 0
        %vm580 = vcmp.ne.s16.totalorder %v576, 0
        %v581 = vsel %vm579, %v557, 0
        %v582 = vsel %vm580, %v566, 0
        %v583 = vsel %vm579, %v558, 0
        %v584 = vsel %vm580, %v567, 0
        %v587 = vunpack.c.l.b16 %v564
        %v588 = vunpack.c.h.b16 %v564
        %v589 = vunpack.c.l.b16 %v565
        %v590 = vunpack.c.h.b16 %v565
        %v591 = vpack.c.b16 %v589, %v587
        %v592 = vpack.c.b16 %v590, %v588
        %v599 = vunpack.c.l.b16 %v557
        %v600 = vunpack.c.h.b16 %v557
        %v601 = vunpack.c.l.b16 %v566
        %v602 = vunpack.c.l.b16 %v558
        %v603 = vunpack.c.h.b16 %v558
        %v604 = vunpack.c.l.b16 %v567
        %v605 = vpack.c.b16 %v602, %v599
        %v606 = vpack.c.b16 %v603, %v600
        %v607 = vpack.c.b16 %v604, %v601
        %608 = vrot.lane.b32.xlu0 %v605, 127
        %v609 = vpop.permute.xlu0 %608
        %610 = vrot.lane.b32.xlu0 %v606, 127
        %v611 = vpop.permute.xlu0 %610
        %612 = vrot.lane.b32.xlu0 %v607, 127
        %v613 = vpop.permute.xlu0 %612
        %vm614 = vcmask 1039360
        %v615 = vsel %vm614, %v609, %v611
        %v616 = vsel %vm614, %v611, %v613
        %v623 = vunpack.c.l.b16 %v581
        %v624 = vunpack.c.h.b16 %v581
        %v625 = vunpack.c.l.b16 %v582
        %v626 = vunpack.c.l.b16 %v583
        %v627 = vunpack.c.h.b16 %v583
        %v628 = vunpack.c.l.b16 %v584
        %v629 = vpack.c.b16 %v626, %v623
        %v630 = vpack.c.b16 %v627, %v624
        %v631 = vpack.c.b16 %v628, %v625
        %632 = vrot.lane.b32.xlu0 %v629, 126
        %v633 = vpop.permute.xlu0 %632
        %634 = vrot.lane.b32.xlu0 %v630, 126
        %v635 = vpop.permute.xlu0 %634
        %636 = vrot.lane.b32.xlu0 %v631, 126
        %v637 = vpop.permute.xlu0 %636
        %vm638 = vcmask 1031168
        %v639 = vsel %vm638, %v633, %v635
        %v640 = vsel %vm638, %v635, %v637
        %v643 = vld [vmem:[#allocation5] sm:$0xf]
        %v644 = vld [vmem:[#allocation5 + $0x4] sm:$0xf]
        %v645 = vld [vmem:[#allocation5 + $0x8] sm:$0xf]
        %v646 = vld [vmem:[#allocation5 + $0xc] sm:$0xf]
        %v647 = vsel %vm563, 65537, 0
        %648 = vrot.lane.b32.xlu0 %v647, 16
        %v649 = vpop.permute.xlu0 %648
        %v650 = vrot.slane %v649, 4
        %vm651 = vcmask 130048
        %v652 = vsel %vm651, %v650, %v649
        %vm653 = vcmp.ne.s16.totalorder %v652, 0
        %vm654 = vcmp.ne.s16.totalorder %v650, 0
        %v655 = vsel %vm653, %v557, 0
        %v656 = vsel %vm654, %v566, 0
        %v657 = vsel %vm653, %v558, 0
        %v658 = vsel %vm654, %v567, 0
        %659 = vrot.lane.b32.xlu0 %v573, 18
        %v660 = vpop.permute.xlu0 %659
        %v661 = vrot.slane %v660, 4
        %vm662 = vcmask 146432
        %v663 = vsel %vm662, %v661, %v660
        %vm664 = vcmp.ne.s16.totalorder %v663, 0
        %vm665 = vcmp.ne.s16.totalorder %v661, 0
        %v666 = vsel %vm664, %v557, 0
        %v667 = vsel %vm665, %v566, 0
        %v668 = vsel %vm664, %v558, 0
        %v669 = vsel %vm665, %v567, 0
        %v674 = vunpack.c.l.b16 %v655
        %v675 = vunpack.c.h.b16 %v655
        %v676 = vunpack.c.l.b16 %v656
        %v677 = vunpack.c.l.b16 %v657
        %v678 = vunpack.c.h.b16 %v657
        %v679 = vunpack.c.l.b16 %v658
        %v680 = vpack.c.b16 %v677, %v674
        %v681 = vpack.c.b16 %v678, %v675
        %v682 = vpack.c.b16 %v679, %v676
        %v687 = vunpack.c.l.b16 %v666
        %v688 = vunpack.c.h.b16 %v666
        %v689 = vunpack.c.l.b16 %v667
        %v690 = vunpack.c.l.b16 %v668
        %v691 = vunpack.c.h.b16 %v668
        %v692 = vunpack.c.l.b16 %v669
        %v693 = vpack.c.b16 %v690, %v687
        %v694 = vpack.c.b16 %v691, %v688
        %v695 = vpack.c.b16 %v692, %v689
        %696 = vrot.lane.b32.xlu0 %v693, 126
        %v697 = vpop.permute.xlu0 %696
        %698 = vrot.lane.b32.xlu0 %v694, 126
        %v699 = vpop.permute.xlu0 %698
        %700 = vrot.lane.b32.xlu0 %v695, 126
        %v701 = vpop.permute.xlu0 %700
        %v702 = vsel %vm638, %v697, %v699
        %v703 = vsel %vm638, %v699, %v701
        %s704 = scalar_lea.vmem [#allocation5], 16
        %v705 = vld [vmem:[%s704] sm:$0xf]
        %v706 = vld [vmem:[%s704 + $0x4] sm:$0xf]
        %v707 = vld [vmem:[%s704 + $0x8] sm:$0xf]
        %v708 = vld [vmem:[%s704 + $0xc] sm:$0xf]
        %v713 = vunpack.c.l.b16 %v705
        %v714 = vunpack.c.l.b16 %v706
        %v715 = vunpack.c.l.b16 %v707
        %v716 = vunpack.c.l.b16 %v708
        %v717 = vpack.c.b16 %v714, %v713
        %v718 = vpack.c.b16 %v716, %v715
        %719 = vrot.lane.b32.xlu0 %v680, 112
        %v720 = vpop.permute.xlu0 %719
        %721 = vrot.lane.b32.xlu0 %v681, 112
        %v722 = vpop.permute.xlu0 %721
        %723 = vrot.lane.b32.xlu0 %v682, 112
        %v724 = vpop.permute.xlu0 %723
        %725 = vrot.lane.b32.xlu0 %v615, 112
        %v726 = vpop.permute.xlu0 %725
        %727 = vrot.lane.b32.xlu0 %v616, 112
        %v728 = vpop.permute.xlu0 %727
        %729 = vrot.lane.b32.xlu0 %v613, 112
        %v730 = vpop.permute.xlu0 %729
        %731 = vrot.lane.b32.xlu0 %v702, 112
        %v732 = vpop.permute.xlu0 %731
        %733 = vrot.lane.b32.xlu0 %v703, 112
        %v734 = vpop.permute.xlu0 %733
        %735 = vrot.lane.b32.xlu0 %v701, 112
        %v736 = vpop.permute.xlu0 %735
        %vm737 = vcmask 916480
        %v738 = vsel %vm737, %v720, %v722
        %v739 = vsel %vm737, %v722, %v724
        %v740 = vsel %vm737, %v726, %v728
        %v741 = vsel %vm737, %v728, %v730
        %v742 = vsel %vm737, %v732, %v734
        %v743 = vsel %vm737, %v734, %v736
        %vm750 = vcmask 392192
        %v752 = vsel %vm750, %v717, 0
        %v755 = vsel %vm750, %v718, 0
        %757 = vmatprep.subr.bf16.mxu0 0
        %758 = vmatpush1.bf16.msra.mxu0 0
        %759 = vmatprep.subr.bf16.mxu0 0
        %760 = vmatpush1.bf16.msra.mxu0 0
        %761 = vmatprep.subr.bf16.mxu0 0
        %762 = vmatpush1.bf16.msra.mxu0 0
        %763 = vmatprep.subr.bf16.mxu0 0
        %764 = vmatpush1.bf16.msra.mxu0 0
        %765 = vmatprep.subr.bf16.mxu0 0
        %766 = vmatpush1.bf16.msra.mxu0 0
        %767 = vmatprep.subr.bf16.mxu0 %v743
        %768 = vmatpush1.bf16.msra.mxu0 %v742
        %769 = vmatprep.subr.bf16.mxu0 %v741
        %770 = vmatpush1.bf16.msra.mxu0 %v740
        %771 = vmatprep.subr.bf16.mxu0 %v739
        %772 = vmatpush1.bf16.msra.mxu0 %v738
        %773 = vmatprep.subr.bf16.mxu0 0
        %774 = vmatpush2.bf16.msra.mxu0 0
        %775 = vmatprep.subr.bf16.mxu0 0
        %776 = vmatpush2.bf16.msra.mxu0 0
        %777 = vmatprep.subr.bf16.mxu0 0
        %778 = vmatpush2.bf16.msra.mxu0 0
        %779 = vmatprep.subr.bf16.mxu0 0
        %780 = vmatpush2.bf16.msra.mxu0 0
        %781 = vmatprep.subr.bf16.mxu0 0
        %782 = vmatpush2.bf16.msra.mxu0 0
        %783 = vmatprep.subr.bf16.mxu0 0
        %784 = vmatpush2.bf16.msra.mxu0 0
        %785 = vmatprep.subr.bf16.mxu0 0
        %786 = vmatpush2.bf16.msra.mxu0 0
        %787 = vmatprep.subr.bf16.mxu0 0
        %788 = vmatpush2.bf16.msra.mxu0 0
        %789 = vmatprep.mubr.bf16.mxu0 0
        %790 = vmatmul.mubr.bf16.gmra.mxu0 %v752
        %v791 = vpop.f32.mrf.mxu0
        %v792 = vadd.f32 0.0, %v791
        %v793 = vpop.f32.mrf.mxu0
        %v794 = vadd.f32 0.0, %v793
        %v795 = vpop.f32.mrf.mxu0
        %v796 = vadd.f32 0.0, %v795
        %v797 = vpop.f32.mrf.mxu0
        %v798 = vadd.f32 0.0, %v797
        %799 = vmatprep.mubr.bf16.mxu0 0
        %800 = vmatmul.mubr.bf16.gmra.mxu0 %v755
        %v801 = vpop.f32.mrf.mxu0
        %v802 = vadd.f32 0.0, %v801
        %v803 = vpop.f32.mrf.mxu0
        %v804 = vadd.f32 0.0, %v803
        %v805 = vpop.f32.mrf.mxu0
        %v806 = vadd.f32 0.0, %v805
        %v807 = vpop.f32.mrf.mxu0
        %v808 = vadd.f32 0.0, %v807
        %809 = vdwg.mxu0
        %v814 = vunpack.c.l.b16 %v643
        %v815 = vunpack.c.l.b16 %v644
        %v816 = vunpack.c.l.b16 %v645
        %v817 = vunpack.c.l.b16 %v646
        %v818 = vpack.c.b16 %v815, %v814
        %v819 = vpack.c.b16 %v817, %v816
        %v821 = vsel %vm750, %v818, 0
        %v824 = vsel %vm750, %v819, 0
        %826 = vmatprep.subr.bf16.mxu0 0
        %827 = vmatpush1.bf16.msra.mxu0 0
        %828 = vmatprep.subr.bf16.mxu0 0
        %829 = vmatpush1.bf16.msra.mxu0 0
        %830 = vmatprep.subr.bf16.mxu0 0
        %831 = vmatpush1.bf16.msra.mxu0 0
        %832 = vmatprep.subr.bf16.mxu0 0
        %833 = vmatpush1.bf16.msra.mxu0 0
        %834 = vmatprep.subr.bf16.mxu0 0
        %835 = vmatpush1.bf16.msra.mxu0 0
        %836 = vmatprep.subr.bf16.mxu0 %v640
        %837 = vmatpush1.bf16.msra.mxu0 %v639
        %838 = vmatprep.subr.bf16.mxu0 %v616
        %839 = vmatpush1.bf16.msra.mxu0 %v615
        %840 = vmatprep.subr.bf16.mxu0 %v592
        %841 = vmatpush1.bf16.msra.mxu0 %v591
        %842 = vmatprep.subr.bf16.mxu0 0
        %843 = vmatpush2.bf16.msra.mxu0 0
        %844 = vmatprep.subr.bf16.mxu0 0
        %845 = vmatpush2.bf16.msra.mxu0 0
        %846 = vmatprep.subr.bf16.mxu0 0
        %847 = vmatpush2.bf16.msra.mxu0 0
        %848 = vmatprep.subr.bf16.mxu0 0
        %849 = vmatpush2.bf16.msra.mxu0 0
        %850 = vmatprep.subr.bf16.mxu0 0
        %851 = vmatpush2.bf16.msra.mxu0 0
        %852 = vmatprep.subr.bf16.mxu0 0
        %853 = vmatpush2.bf16.msra.mxu0 0
        %854 = vmatprep.subr.bf16.mxu0 0
        %855 = vmatpush2.bf16.msra.mxu0 0
        %856 = vmatprep.subr.bf16.mxu0 0
        %857 = vmatpush2.bf16.msra.mxu0 0
        %858 = vmatprep.mubr.bf16.mxu0 0
        %859 = vmatmul.mubr.bf16.gmra.mxu0 %v821
        %v860 = vpop.f32.mrf.mxu0
        %v861 = vadd.f32 %v792, %v860
        %v862 = vpop.f32.mrf.mxu0
        %v863 = vadd.f32 %v794, %v862
        %v864 = vpop.f32.mrf.mxu0
        %v865 = vadd.f32 %v796, %v864
        %v866 = vpop.f32.mrf.mxu0
        %v867 = vadd.f32 %v798, %v866
        %868 = vmatprep.mubr.bf16.mxu0 0
        %869 = vmatmul.mubr.bf16.gmra.mxu0 %v824
        %v870 = vpop.f32.mrf.mxu0
        %v871 = vadd.f32 %v802, %v870
        %v872 = vpop.f32.mrf.mxu0
        %v873 = vadd.f32 %v804, %v872
        %v874 = vpop.f32.mrf.mxu0
        %v875 = vadd.f32 %v806, %v874
        %v876 = vpop.f32.mrf.mxu0
        %v877 = vadd.f32 %v808, %v876
        %878 = vdwg.mxu0
        %879 = vrot.lane.b32.xlu0 %v647, 32
        %v880 = vpop.permute.xlu0 %879
        %v881 = vrot.slane %v880, 4
        %vm882 = vcmask 261120
        %v883 = vsel %vm882, %v881, %v880
        %vm884 = vcmp.ne.s16.totalorder %v883, 0
        %vm885 = vcmp.ne.s16.totalorder %v881, 0
        %v886 = vsel %vm884, %v557, 0
        %v887 = vsel %vm885, %v566, 0
        %v888 = vsel %vm884, %v558, 0
        %v889 = vsel %vm885, %v567, 0
        %890 = vrot.lane.b32.xlu0 %v573, 34
        %v891 = vpop.permute.xlu0 %890
        %v892 = vrot.slane %v891, 4
        %vm893 = vcmask 277504
        %v894 = vsel %vm893, %v892, %v891
        %vm895 = vcmp.ne.s16.totalorder %v894, 0
        %vm896 = vcmp.ne.s16.totalorder %v892, 0
        %v897 = vsel %vm895, %v557, 0
        %v898 = vsel %vm896, %v566, 0
        %v899 = vsel %vm895, %v558, 0
        %v900 = vsel %vm896, %v567, 0
        %v905 = vunpack.c.l.b16 %v886
        %v906 = vunpack.c.h.b16 %v886
        %v907 = vunpack.c.l.b16 %v887
        %v908 = vunpack.c.l.b16 %v888
        %v909 = vunpack.c.h.b16 %v888
        %v910 = vunpack.c.l.b16 %v889
        %v911 = vpack.c.b16 %v908, %v905
        %v912 = vpack.c.b16 %v909, %v906
        %v913 = vpack.c.b16 %v910, %v907
        %v918 = vunpack.c.l.b16 %v897
        %v919 = vunpack.c.h.b16 %v897
        %v920 = vunpack.c.l.b16 %v898
        %v921 = vunpack.c.l.b16 %v899
        %v922 = vunpack.c.h.b16 %v899
        %v923 = vunpack.c.l.b16 %v900
        %v924 = vpack.c.b16 %v921, %v918
        %v925 = vpack.c.b16 %v922, %v919
        %v926 = vpack.c.b16 %v923, %v920
        %927 = vrot.lane.b32.xlu0 %v924, 126
        %v928 = vpop.permute.xlu0 %927
        %929 = vrot.lane.b32.xlu0 %v925, 126
        %v930 = vpop.permute.xlu0 %929
        %931 = vrot.lane.b32.xlu0 %v926, 126
        %v932 = vpop.permute.xlu0 %931
        %v933 = vsel %vm638, %v928, %v930
        %v934 = vsel %vm638, %v930, %v932
        %s935 = scalar_lea.vmem [#allocation5], 32
        %v936 = vld [vmem:[%s935] sm:$0xf]
        %v937 = vld [vmem:[%s935 + $0x4] sm:$0xf]
        %v938 = vld [vmem:[%s935 + $0x8] sm:$0xf]
        %v939 = vld [vmem:[%s935 + $0xc] sm:$0xf]
        %v944 = vunpack.c.l.b16 %v936
        %v945 = vunpack.c.l.b16 %v937
        %v946 = vunpack.c.l.b16 %v938
        %v947 = vunpack.c.l.b16 %v939
        %v948 = vpack.c.b16 %v945, %v944
        %v949 = vpack.c.b16 %v947, %v946
        %950 = vrot.lane.b32.xlu0 %v911, 96
        %v951 = vpop.permute.xlu0 %950
        %952 = vrot.lane.b32.xlu0 %v912, 96
        %v953 = vpop.permute.xlu0 %952
        %954 = vrot.lane.b32.xlu0 %v913, 96
        %v955 = vpop.permute.xlu0 %954
        %956 = vrot.lane.b32.xlu0 %v615, 96
        %v957 = vpop.permute.xlu0 %956
        %958 = vrot.lane.b32.xlu0 %v616, 96
        %v959 = vpop.permute.xlu0 %958
        %960 = vrot.lane.b32.xlu0 %v613, 96
        %v961 = vpop.permute.xlu0 %960
        %962 = vrot.lane.b32.xlu0 %v933, 96
        %v963 = vpop.permute.xlu0 %962
        %964 = vrot.lane.b32.xlu0 %v934, 96
        %v965 = vpop.permute.xlu0 %964
        %966 = vrot.lane.b32.xlu0 %v932, 96
        %v967 = vpop.permute.xlu0 %966
        %vm968 = vcmask 785408
        %v969 = vsel %vm968, %v951, %v953
        %v970 = vsel %vm968, %v953, %v955
        %v971 = vsel %vm968, %v957, %v959
        %v972 = vsel %vm968, %v959, %v961
        %v973 = vsel %vm968, %v963, %v965
        %v974 = vsel %vm968, %v965, %v967
        %v982 = vsel %vm750, %v948, 0
        %v985 = vsel %vm750, %v949, 0
        %987 = vmatprep.subr.bf16.mxu0 0
        %988 = vmatpush1.bf16.msra.mxu0 0
        %989 = vmatprep.subr.bf16.mxu0 0
        %990 = vmatpush1.bf16.msra.mxu0 0
        %991 = vmatprep.subr.bf16.mxu0 0
        %992 = vmatpush1.bf16.msra.mxu0 0
        %993 = vmatprep.subr.bf16.mxu0 0
        %994 = vmatpush1.bf16.msra.mxu0 0
        %995 = vmatprep.subr.bf16.mxu0 0
        %996 = vmatpush1.bf16.msra.mxu0 0
        %997 = vmatprep.subr.bf16.mxu0 %v974
        %998 = vmatpush1.bf16.msra.mxu0 %v973
        %999 = vmatprep.subr.bf16.mxu0 %v972
        %1000 = vmatpush1.bf16.msra.mxu0 %v971
        %1001 = vmatprep.subr.bf16.mxu0 %v970
        %1002 = vmatpush1.bf16.msra.mxu0 %v969
        %1003 = vmatprep.subr.bf16.mxu0 0
        %1004 = vmatpush2.bf16.msra.mxu0 0
        %1005 = vmatprep.subr.bf16.mxu0 0
        %1006 = vmatpush2.bf16.msra.mxu0 0
        %1007 = vmatprep.subr.bf16.mxu0 0
        %1008 = vmatpush2.bf16.msra.mxu0 0
        %1009 = vmatprep.subr.bf16.mxu0 0
        %1010 = vmatpush2.bf16.msra.mxu0 0
        %1011 = vmatprep.subr.bf16.mxu0 0
        %1012 = vmatpush2.bf16.msra.mxu0 0
        %1013 = vmatprep.subr.bf16.mxu0 0
        %1014 = vmatpush2.bf16.msra.mxu0 0
        %1015 = vmatprep.subr.bf16.mxu0 0
        %1016 = vmatpush2.bf16.msra.mxu0 0
        %1017 = vmatprep.subr.bf16.mxu0 0
        %1018 = vmatpush2.bf16.msra.mxu0 0
        %1019 = vmatprep.mubr.bf16.mxu0 0
        %1020 = vmatmul.mubr.bf16.gmra.mxu0 %v982
        %v1021 = vpop.f32.mrf.mxu0
        %v1022 = vadd.f32 0.0, %v1021
        %v1023 = vpop.f32.mrf.mxu0
        %v1024 = vadd.f32 0.0, %v1023
        %v1025 = vpop.f32.mrf.mxu0
        %v1026 = vadd.f32 0.0, %v1025
        %v1027 = vpop.f32.mrf.mxu0
        %v1028 = vadd.f32 0.0, %v1027
        %1029 = vmatprep.mubr.bf16.mxu0 0
        %1030 = vmatmul.mubr.bf16.gmra.mxu0 %v985
        %v1031 = vpop.f32.mrf.mxu0
        %v1032 = vadd.f32 0.0, %v1031
        %v1033 = vpop.f32.mrf.mxu0
        %v1034 = vadd.f32 0.0, %v1033
        %v1035 = vpop.f32.mrf.mxu0
        %v1036 = vadd.f32 0.0, %v1035
        %v1037 = vpop.f32.mrf.mxu0
        %v1038 = vadd.f32 0.0, %v1037
        %1039 = vdwg.mxu0
        %v1040 = vadd.f32 %v861, %v1022
        %v1041 = vadd.f32 %v863, %v1024
        %v1042 = vadd.f32 %v865, %v1026
        %v1043 = vadd.f32 %v867, %v1028
        %v1044 = vadd.f32 %v871, %v1032
        %v1045 = vadd.f32 %v873, %v1034
        %v1046 = vadd.f32 %v875, %v1036
        %v1047 = vadd.f32 %v877, %v1038
        %v1048 = vadd.f32 %v1040, %v1041
        %1049 = vadd.xlane.f32.xlu0 %v1048
        %v1050 = vpop.xlane.xlu0 %1049
        %v1051 = vadd.f32 %v1042, %v1043
        %1052 = vadd.xlane.f32.xlu0 %v1051
        %v1053 = vpop.xlane.xlu0 %1052
        %v1054 = vadd.f32 %v1044, %v1045
        %1055 = vadd.xlane.f32.xlu0 %v1054
        %v1056 = vpop.xlane.xlu0 %1055
        %v1057 = vadd.f32 %v1046, %v1047
        %1058 = vadd.xlane.f32.xlu0 %v1057
        %v1059 = vpop.xlane.xlu0 %1058
        %1060 = vst.msk [vmem:[%s362] sm:$0xff] %vm391, %v1050
        %1061 = vst.msk [vmem:[%s362 + $0x8] sm:$0xff] %vm391, %v1053
        %1062 = vst.msk [vmem:[%s362 + $0x10] sm:$0xff] %vm391, %v1056
        %1063 = vst.msk [vmem:[%s362 + $0x18] sm:$0xff] %vm391, %v1059
        %v1064 = vmul.f32 %v1040, %v1040
        %v1065 = vmul.f32 %v1041, %v1041
        %v1066 = vmul.f32 %v1042, %v1042
        %v1067 = vmul.f32 %v1043, %v1043
        %v1068 = vmul.f32 %v1044, %v1044
        %v1069 = vmul.f32 %v1045, %v1045
        %v1070 = vmul.f32 %v1046, %v1046
        %v1071 = vmul.f32 %v1047, %v1047
        %v1072 = vadd.f32 %v1064, %v1065
        %1073 = vadd.xlane.f32.xlu0 %v1072
        %v1074 = vpop.xlane.xlu0 %1073
        %v1075 = vadd.f32 %v1066, %v1067
        %1076 = vadd.xlane.f32.xlu0 %v1075
        %v1077 = vpop.xlane.xlu0 %1076
        %v1078 = vadd.f32 %v1068, %v1069
        %1079 = vadd.xlane.f32.xlu0 %v1078
        %v1080 = vpop.xlane.xlu0 %1079
        %v1081 = vadd.f32 %v1070, %v1071
        %1082 = vadd.xlane.f32.xlu0 %v1081
        %v1083 = vpop.xlane.xlu0 %1082
        %vm1084 = vcmask 15368
        %1085 = vst.msk [vmem:[%s362] sm:$0xff] %vm1084, %v1074
        %1086 = vst.msk [vmem:[%s362 + $0x8] sm:$0xff] %vm1084, %v1077
        %1087 = vst.msk [vmem:[%s362 + $0x10] sm:$0xff] %vm1084, %v1080
        %1088 = vst.msk [vmem:[%s362 + $0x18] sm:$0xff] %vm1084, %v1083
        %1089 = vst [vmem:[%s345] sm:$0xff] %v1040
        %1090 = vst [vmem:[%s345 + $0x8] sm:$0xff] %v1041
        %1091 = vst [vmem:[%s345 + $0x10] sm:$0xff] %v1042
        %1092 = vst [vmem:[%s345 + $0x18] sm:$0xff] %v1043
        %1093 = vst [vmem:[%s345 + $0x20] sm:$0xff] %v1044
        %1094 = vst [vmem:[%s345 + $0x28] sm:$0xff] %v1045
        %1095 = vst [vmem:[%s345 + $0x30] sm:$0xff] %v1046
        %1096 = vst [vmem:[%s345 + $0x38] sm:$0xff] %v1047
        %s1097 = sand.u32 %s210, 1
        %s1098 = scalar_lea.sflag [#allocation7], %s1097
        %s1099 = sand.u32 %s210, 1
        %s1100 = smul.addr %s1099, 64
        %s1101 = scalar_lea.vmem [#allocation8], %s1100
        %p1102 = scmp.lt.s32.totalorder %s29, 1
        %s1103 = scalar_select %p1102, %s29, 1
        %s1104 = smul.addr %s1103, 4
        %s1105 = smul.addr %s1104, 8
        %s1106 = scalar_lea.vmem %s9, %s1105
        // Predicated region
        $region57: #{tpu_custom_call.1} parent=51 // pred_check
          %p1107 = pneg %p220
        $region58: #{tpu_custom_call.1} parent=51 // pred_check_branch
          %1109 = sbr.rel (%p1107) target = $region60
        $region59: #{tpu_custom_call.1} parent=51 // pred_region
          %s1111 = ssub.s32 1024, 1024
          %1112 = vsyncadd %s1098, %s1111
          %s1113 = smul.addr %s29, 8
          %s1114 = smul.addr %s1113, 128
          %s1115 = scalar_lea.hbm %s8, %s1114
          %s1116 = sshll.u32 %s1101, 4
          %s1117 = int_to_ptr.vmem [resolvable:$true] %s1116
          %1122 = dma.vmem_to_hbm [thread:$0]  %s1117, 1024, %s1115, %s1098, 256, 256, 16
        $region60: #{tpu_custom_call.1} parent=51 // pred_fallthru
          _
        // Predicated region
        $region61: #{tpu_custom_call.1} parent=51 // pred_check
          %p1123 = pneg %p246
        $region62: #{tpu_custom_call.1} parent=51 // pred_check_branch
          %1125 = sbr.rel (%p1123) target = $region64
        $region63: #{tpu_custom_call.1} parent=51 // pred_region
          _
        $region64: #{tpu_custom_call.1} parent=51 // pred_fallthru
          _
      $region52: #{tpu_custom_call.1} parent=5 // pred_fallthru
        _
      %p1126 = scmp.le.s32.totalorder 2, %s24
      // Predicated region
      $region65: #{tpu_custom_call.1} parent=5 // pred_check
        %p1127 = pneg %p1126
      $region66: #{tpu_custom_call.1} parent=5 // pred_check_branch
        %1129 = sbr.rel (%p1127) target = $region68
      $region67: #{tpu_custom_call.1} parent=5 // pred_region
        %s1130 = ssub.s32 %s24, 2
        // Predicated region
        $region69: #{tpu_custom_call.1} parent=67 // pred_check
          %p1131 = pneg %p226
        $region70: #{tpu_custom_call.1} parent=67 // pred_check_branch
          %1133 = sbr.rel (%p1131) target = $region72
        $region71: #{tpu_custom_call.1} parent=67 // pred_region
          %s1134 = sand.u32 %s211, 1
          %s1135 = scalar_lea.sflag [#allocation7], %s1134
          %s1136 = sand.u32 %s211, 1
          %s1137 = smul.addr %s1136, 64
          %s1138 = scalar_lea.vmem [#allocation8], %s1137
          %1139 = dma.done %s1135, 1024
        $region72: #{tpu_custom_call.1} parent=67 // pred_fallthru
          _
        // Predicated region
        $region73: #{tpu_custom_call.1} parent=67 // pred_check
          %p1140 = pneg %p252
        $region74: #{tpu_custom_call.1} parent=67 // pred_check_branch
          %1142 = sbr.rel (%p1140) target = $region76
        $region75: #{tpu_custom_call.1} parent=67 // pred_region
          %p1143 = scmp.lt.s32.totalorder %s30, 1
          %s1144 = scalar_select %p1143, %s30, 1
          %s1145 = smul.addr %s1144, 4
          %s1146 = smul.addr %s1145, 8
          %s1147 = scalar_lea.vmem %s9, %s1146
        $region76: #{tpu_custom_call.1} parent=67 // pred_fallthru
          _
      $region68: #{tpu_custom_call.1} parent=5 // pred_fallthru
        _
    $region6: #{tpu_custom_call.1} parent=1 // loop_footer
      %s28 = sadd.s32 1, %s24
    $region7: #{tpu_custom_call.1} parent=1 // loop_footer_branch
      %23 = sbr.rel target = $region3
    $region8: #{tpu_custom_call.1} parent=1 // loop_exit
      _
    %1148 = vsyncpa [#allocation6], 1
    %s1149 = scalar_lea.sflag [#allocation6], 1
    %1150 = vsyncpa %s1149, 1
    %1151 = vsyncpa [#allocation7], 1
    %s1152 = scalar_lea.sflag [#allocation7], 1
    %1153 = vsyncpa %s1152, 1

</llo_original>
